<compile_context>
chip_gen: v7x
topology: tpu7x:2x2x1
jax: 0.10.0
libtpu: 0.0.40
codegen_flags: <defaults>
</compile_context>

<pallas_src>
import functools

import jax
import jax.numpy as jnp
from jax import lax
from jax.experimental import pallas as pl
from jax.experimental.pallas import tpu as pltpu


# ----------------------------------------------------------------------------- kernel

def dqn_kernel(tau_ref, x_ref,
               iqn_w_ref, iqn_b_ref,
               w1_ref, b1_ref, w2_ref, b2_ref, w3_ref, b3_ref,
               z_ref, *, act_dtype):
    tm = tau_ref.shape[0]                 # rows in this tile (= tq * bsz)
    bsz, feat = x_ref.shape
    tq = tm // bsz                        # whole quantile groups per tile
    qed_pad = iqn_w_ref.shape[0]          # quantile embedding dim, padded to 128

    # ---- cos embedding: cos(arange(1..Qed) * pi * tau) ----
    tau = tau_ref[...]                                                    # (TM, 1) f32
    coef = (lax.broadcasted_iota(jnp.int32, (1, qed_pad), 1)
            .astype(jnp.float32) + 1.0) * jnp.pi
    cos_tau = jnp.cos(tau * coef)                                         # (TM, Qed_pad)
    # columns >= qed hit zero-padded weight rows, so they contribute nothing.

    # ---- quantile embedding: phi = relu(cos_tau @ W_iqn + b_iqn) ----
    phi = jnp.dot(cos_tau.astype(jnp.bfloat16), iqn_w_ref[...],
                  preferred_element_type=jnp.float32) + iqn_b_ref[...]
    phi = jnp.maximum(phi, 0.0).astype(act_dtype)                         # (TM, F)

    # ---- state features broadcast in-kernel (no HBM/VMEM tile(x, (Q,1))) ----
    x_b = x_ref[...].astype(act_dtype)                                    # (bsz, F)
    if bsz % 8 == 0:
        xx = (phi.reshape(tq, bsz, feat) * x_b[None, :, :]).reshape(tm, feat)
    else:
        xx = jnp.tile(x_b, (tq, 1)) * phi

    # ---- MLP [F -> H1 -> H2 -> A_pad], relu hidden, linear out, f32 accumulate ----
    h1 = jnp.dot(xx.astype(jnp.bfloat16), w1_ref[...],
                 preferred_element_type=jnp.float32) + b1_ref[...]
    h1 = jnp.maximum(h1, 0.0).astype(act_dtype)
    h2 = jnp.dot(h1.astype(jnp.bfloat16), w2_ref[...],
                 preferred_element_type=jnp.float32) + b2_ref[...]
    h2 = jnp.maximum(h2, 0.0).astype(act_dtype)
    # lane-dense (TM, A_pad) store; wrapper slices the real action_dim
    z_ref[...] = (jnp.dot(h2.astype(jnp.bfloat16), w3_ref[...],
                          preferred_element_type=jnp.float32) + b3_ref[...])


# ----------------------------------------------------------------------------- helpers

def _round_up(v, m):
    return ((v + m - 1) // m) * m


def _device_kind():
    try:
        return jax.devices()[0].device_kind.lower()
    except Exception:
        return "unknown"


def _default_bf16_elementwise():
    """bf16 elementwise activations only where the VPU has a bf16 path (v6e/v7x)."""
    kind = _device_kind()
    if "tpu" not in kind:
        return False
    return not any(t in kind for t in ("v2", "v3", "v4", "v5"))


def _default_max_tile_rows():
    """Cap the row tile lower on v7x (64 MiB VMEM) than on v5e/v6e (128 MiB)."""
    kind = _device_kind()
    return 512 if "v7" in kind else 1024


def _choose_tile_quantiles(num_quantiles, bsz, max_rows):
    """Largest divisor tq of num_quantiles with tq*bsz a multiple of 8 and <= max_rows.
    Falls back to a single full-N tile (block == full dim is always legal)."""
    best = None
    for tq in range(1, num_quantiles + 1):
        if num_quantiles % tq:
            continue
        rows = tq * bsz
        if rows % 8 == 0 and rows <= max_rows:
            best = tq
    return best if best is not None else num_quantiles


# ----------------------------------------------------------------------------- wrapper

def dq_network_forward(x, num_quantiles, params, action_dim, *, key,
                       max_tile_rows=None, bf16_elementwise=None):
    """Full DQNetwork forward. cos embedding, x broadcast and all matmuls fused into one
    row-gridded pallas_call; tau sampling and the final slice/reshape stay in JAX."""
    bsz, feat = x.shape
    qed_pad = params["iqn_w"].shape[0]
    h1w = params["w1"].shape[1]
    h2w = params["w2"].shape[1]
    a_pad = params["w3"].shape[1]
    n = num_quantiles * bsz

    if bf16_elementwise is None:
        bf16_elementwise = _default_bf16_elementwise()
    if max_tile_rows is None:
        max_tile_rows = _default_max_tile_rows()

    tq = _choose_tile_quantiles(num_quantiles, bsz, max_tile_rows)
    tm = tq * bsz
    grid = (num_quantiles // tq,)

    # tau ~ U(0,1); same row ordering as torch's x.repeat(num_quantiles, 1).
    tau = jax.random.uniform(key, (n, 1), dtype=jnp.float32)

    act_dtype = jnp.bfloat16 if bf16_elementwise else jnp.float32
    kernel = functools.partial(dqn_kernel, act_dtype=act_dtype)

    # Row-blocked activations; weights / biases / x fully VMEM-resident.
    in_specs = [
        pl.BlockSpec((tm, 1), lambda i: (i, 0)),                      # tau
        pl.BlockSpec(x.shape, lambda i: (0, 0)),                      # x
        pl.BlockSpec(params["iqn_w"].shape, lambda i: (0, 0)),
        pl.BlockSpec(params["iqn_b"].shape, lambda i: (0, 0)),
        pl.BlockSpec(params["w1"].shape, lambda i: (0, 0)),
        pl.BlockSpec(params["b1"].shape, lambda i: (0, 0)),
        pl.BlockSpec(params["w2"].shape, lambda i: (0, 0)),
        pl.BlockSpec(params["b2"].shape, lambda i: (0, 0)),
        pl.BlockSpec(params["w3"].shape, lambda i: (0, 0)),
        pl.BlockSpec(params["b3"].shape, lambda i: (0, 0)),
    ]
    out_specs = pl.BlockSpec((tm, a_pad), lambda i: (i, 0))

    weight_keys = ("iqn_w", "iqn_b", "w1", "b1", "w2", "b2", "w3", "b3")
    weight_bytes = sum(int(params[k].nbytes) for k in weight_keys) + int(x.nbytes)
    flops = 2 * n * (qed_pad * feat + feat * h1w + h1w * h2w + h2w * a_pad)
    bytes_accessed = weight_bytes + int(tau.nbytes) + n * a_pad * 4
    cost = pl.CostEstimate(flops=int(flops), transcendentals=int(n * qed_pad),
                           bytes_accessed=int(bytes_accessed))

    # Rough per-tile live set (f32 upper bound) + double-buffer headroom.
    tile_bytes = tm * (qed_pad + 2 * feat + h1w + h2w + 2 * a_pad) * 4
    vmem_limit = int(min(64 << 20, max(32 << 20, weight_bytes + 4 * tile_bytes)))

    z_pad = pl.pallas_call(
        kernel,
        out_shape=jax.ShapeDtypeStruct((n, a_pad), jnp.float32),
        grid=grid,
        in_specs=in_specs,
        out_specs=out_specs,
        compiler_params=pltpu.CompilerParams(
            dimension_semantics=("parallel",),      # shards the row grid over v7x's 2 TCs
            vmem_limit_bytes=vmem_limit),
        cost_estimate=cost,
    )(tau, x,
      params["iqn_w"], params["iqn_b"],
      params["w1"], params["b1"],
      params["w2"], params["b2"],
      params["w3"], params["b3"])

    # Faithful to the PyTorch `.view(-1, action_dim, num_quantiles)` reinterpretation.
    z = z_pad[:, :action_dim].reshape(-1, action_dim, num_quantiles)
    return z, tau


# ----------------------------------------------------------------------------- params

def init_params(key, in_features, qed, hidden_sizes, action_dim, *, lane=128):
    """Deterministic synthetic parameters. Weight matrices stored transposed
    (in_dim, out_dim) in bf16 for the MXU; biases in f32. The quantile-embedding K dim
    and the output N dim are zero-padded to lane multiples (128)."""
    ks = jax.random.split(key, 5)
    scale = 0.05
    h1, h2 = hidden_sizes
    qed_pad = _round_up(qed, lane)
    a_pad = _round_up(action_dim, lane)

    iqn_w = scale * jax.random.normal(ks[0], (qed, in_features), jnp.float32)
    iqn_w_pad = jnp.zeros((qed_pad, in_features), jnp.float32).at[:qed, :].set(iqn_w)

    w3 = scale * jax.random.normal(ks[3], (h2, action_dim), jnp.float32)
    w3_pad = jnp.zeros((h2, a_pad), jnp.float32).at[:, :action_dim].set(w3)

    return {
        # iqn_fc: Linear(qed -> in_features); (synthetic) nonzero bias init
        "iqn_w": iqn_w_pad.astype(jnp.bfloat16),
        "iqn_b": scale * jax.random.normal(ks[4], (1, in_features), jnp.float32),
        # MLP: Linear biases are zero-initialized in the module
        "w1": (scale * jax.random.normal(ks[1], (in_features, h1),
                                         jnp.float32)).astype(jnp.bfloat16),
        "b1": jnp.zeros((1, h1), jnp.float32),
        "w2": (scale * jax.random.normal(ks[2], (h1, h2),
                                         jnp.float32)).astype(jnp.bfloat16),
        "b2": jnp.zeros((1, h2), jnp.float32),
        "w3": w3_pad.astype(jnp.bfloat16),
        "b3": jnp.zeros((1, a_pad), jnp.float32),
    }


# ----------------------------------------------------------------------------- demo

if __name__ == "__main__":
    # Small shapes consistent with the module (hidden_sizes shrunk from (400, 300)).
    bsz = 8
    in_features = 128
    quantile_embedding_dim = 64
    hidden_sizes = (128, 128)
    action_dim = 8
    num_quantiles = 16

    root = jax.random.PRNGKey(0)
    k_param, k_x, k_tau = jax.random.split(root, 3)

    params = init_params(k_param, in_features, quantile_embedding_dim,
                         hidden_sizes, action_dim)
    x = jax.random.normal(k_x, (bsz, in_features), jnp.float32)

    # max_tile_rows=64 -> TM=64 rows (8 quantile groups), grid=(2,): exercises the
    # pipelined row-grid path even at demo size.
    z, tau = dq_network_forward(x, num_quantiles, params, action_dim,
                                key=k_tau, max_tile_rows=64)
    z = jax.block_until_ready(z)
    tau = jax.block_until_ready(tau)

    assert z.shape == (bsz, action_dim, num_quantiles), z.shape
    assert tau.shape == (num_quantiles * bsz, 1), tau.shape
    assert bool(jnp.all(jnp.isfinite(z)))
    assert bool(jnp.all((tau >= 0.0) & (tau < 1.0)))

    print("KERNEL_OK")
</pallas_src>

<mosaic_0001>
module attributes {stable_mosaic.version = 11 : i64} {
  func.func @dqn_kernel(%arg0: i32, %arg1: memref<64x1xf32, #tpu.memory_space<vmem>>, %arg2: memref<8x128xf32, #tpu.memory_space<vmem>>, %arg3: memref<128x128xbf16, #tpu.memory_space<vmem>>, %arg4: memref<1x128xf32, #tpu.memory_space<vmem>>, %arg5: memref<128x128xbf16, #tpu.memory_space<vmem>>, %arg6: memref<1x128xf32, #tpu.memory_space<vmem>>, %arg7: memref<128x128xbf16, #tpu.memory_space<vmem>>, %arg8: memref<1x128xf32, #tpu.memory_space<vmem>>, %arg9: memref<128x128xbf16, #tpu.memory_space<vmem>>, %arg10: memref<1x128xf32, #tpu.memory_space<vmem>>, %arg11: memref<64x128xf32, #tpu.memory_space<vmem>>) attributes {dimension_semantics = [#tpu.dimension_semantics<parallel>], iteration_bounds = array<i64: 2>, scalar_prefetch = 0 : i64, scratch_operands = 0 : i64, tpu.core_type = #tpu.core_type<tc>, window_params = [{transform_indices = @transform_0, window_bounds = array<i64: 64, 1>}, {pipeline_mode = #tpu.pipeline_mode<synchronous>, transform_indices = @transform_1, window_bounds = array<i64: 8, 128>}, {pipeline_mode = #tpu.pipeline_mode<synchronous>, transform_indices = @transform_2, window_bounds = array<i64: 128, 128>}, {pipeline_mode = #tpu.pipeline_mode<synchronous>, transform_indices = @transform_3, window_bounds = array<i64: 1, 128>}, {pipeline_mode = #tpu.pipeline_mode<synchronous>, transform_indices = @transform_4, window_bounds = array<i64: 128, 128>}, {pipeline_mode = #tpu.pipeline_mode<synchronous>, transform_indices = @transform_5, window_bounds = array<i64: 1, 128>}, {pipeline_mode = #tpu.pipeline_mode<synchronous>, transform_indices = @transform_6, window_bounds = array<i64: 128, 128>}, {pipeline_mode = #tpu.pipeline_mode<synchronous>, transform_indices = @transform_7, window_bounds = array<i64: 1, 128>}, {pipeline_mode = #tpu.pipeline_mode<synchronous>, transform_indices = @transform_8, window_bounds = array<i64: 128, 128>}, {pipeline_mode = #tpu.pipeline_mode<synchronous>, transform_indices = @transform_9, window_bounds = array<i64: 1, 128>}, {transform_indices = @transform_10, window_bounds = array<i64: 64, 128>}]} {
    %c0 = arith.constant 0 : index
    %c0_0 = arith.constant 0 : index
    %0 = vector.load %arg1[%c0, %c0_0] : memref<64x1xf32, #tpu.memory_space<vmem>>, vector<64x1xf32>
    %1 = tpu.iota {dimensions = array<i32: 1>} : vector<1x128xi32>
    %2 = arith.sitofp %1 : vector<1x128xi32> to vector<1x128xf32>
    %cst = arith.constant 1.000000e+00 : f32
    %3 = vector.broadcast %cst : f32 to vector<1x128xf32>
    %4 = arith.addf %2, %3 : vector<1x128xf32>
    %cst_1 = arith.constant 3.14159274 : f32
    %5 = vector.broadcast %cst_1 : f32 to vector<1x128xf32>
    %6 = arith.mulf %4, %5 : vector<1x128xf32>
    %7 = vector.broadcast %0 : vector<64x1xf32> to vector<64x128xf32>
    %8 = vector.broadcast %6 : vector<1x128xf32> to vector<64x128xf32>
    %9 = arith.mulf %7, %8 : vector<64x128xf32>
    %10 = math.cos %9 : vector<64x128xf32>
    %11 = arith.truncf %10 : vector<64x128xf32> to vector<64x128xbf16>
    %c0_2 = arith.constant 0 : index
    %c0_3 = arith.constant 0 : index
    %12 = vector.load %arg3[%c0_2, %c0_3] : memref<128x128xbf16, #tpu.memory_space<vmem>>, vector<128x128xbf16>
    %cst_4 = arith.constant dense<0.000000e+00> : vector<64x128xf32>
    %13 = tpu.matmul %11, %12, %cst_4 {dimension_numbers = #tpu.dot_dimension_numbers<[1], [0], [0], [1], [0, 0, 1, 1], [], []>} : vector<64x128xbf16>, vector<128x128xbf16>, vector<64x128xf32> -> vector<64x128xf32>
    %c0_5 = arith.constant 0 : index
    %c0_6 = arith.constant 0 : index
    %14 = vector.load %arg4[%c0_5, %c0_6] : memref<1x128xf32, #tpu.memory_space<vmem>>, vector<1x128xf32>
    %15 = vector.broadcast %14 : vector<1x128xf32> to vector<64x128xf32>
    %16 = arith.addf %13, %15 : vector<64x128xf32>
    %cst_7 = arith.constant 0.000000e+00 : f32
    %17 = vector.broadcast %cst_7 : f32 to vector<64x128xf32>
    %18 = arith.maximumf %16, %17 : vector<64x128xf32>
    %c0_8 = arith.constant 0 : index
    %c0_9 = arith.constant 0 : index
    %19 = vector.load %arg2[%c0_8, %c0_9] : memref<8x128xf32, #tpu.memory_space<vmem>>, vector<8x128xf32>
    %20 = vector.shape_cast %18 : vector<64x128xf32> to vector<8x8x128xf32>
    %21 = vector.shape_cast %19 : vector<8x128xf32> to vector<1x8x128xf32>
    %22 = vector.broadcast %21 : vector<1x8x128xf32> to vector<8x8x128xf32>
    %23 = arith.mulf %20, %22 : vector<8x8x128xf32>
    %24 = vector.shape_cast %23 : vector<8x8x128xf32> to vector<64x128xf32>
    %25 = arith.truncf %24 : vector<64x128xf32> to vector<64x128xbf16>
    %c0_10 = arith.constant 0 : index
    %c0_11 = arith.constant 0 : index
    %26 = vector.load %arg5[%c0_10, %c0_11] : memref<128x128xbf16, #tpu.memory_space<vmem>>, vector<128x128xbf16>
    %cst_12 = arith.constant dense<0.000000e+00> : vector<64x128xf32>
    %27 = tpu.matmul %25, %26, %cst_12 {dimension_numbers = #tpu.dot_dimension_numbers<[1], [0], [0], [1], [0, 0, 1, 1], [], []>} : vector<64x128xbf16>, vector<128x128xbf16>, vector<64x128xf32> -> vector<64x128xf32>
    %c0_13 = arith.constant 0 : index
    %c0_14 = arith.constant 0 : index
    %28 = vector.load %arg6[%c0_13, %c0_14] : memref<1x128xf32, #tpu.memory_space<vmem>>, vector<1x128xf32>
    %29 = vector.broadcast %28 : vector<1x128xf32> to vector<64x128xf32>
    %30 = arith.addf %27, %29 : vector<64x128xf32>
    %cst_15 = arith.constant 0.000000e+00 : f32
    %31 = vector.broadcast %cst_15 : f32 to vector<64x128xf32>
    %32 = arith.maximumf %30, %31 : vector<64x128xf32>
    %33 = arith.truncf %32 : vector<64x128xf32> to vector<64x128xbf16>
    %c0_16 = arith.constant 0 : index
    %c0_17 = arith.constant 0 : index
    %34 = vector.load %arg7[%c0_16, %c0_17] : memref<128x128xbf16, #tpu.memory_space<vmem>>, vector<128x128xbf16>
    %cst_18 = arith.constant dense<0.000000e+00> : vector<64x128xf32>
    %35 = tpu.matmul %33, %34, %cst_18 {dimension_numbers = #tpu.dot_dimension_numbers<[1], [0], [0], [1], [0, 0, 1, 1], [], []>} : vector<64x128xbf16>, vector<128x128xbf16>, vector<64x128xf32> -> vector<64x128xf32>
    %c0_19 = arith.constant 0 : index
    %c0_20 = arith.constant 0 : index
    %36 = vector.load %arg8[%c0_19, %c0_20] : memref<1x128xf32, #tpu.memory_space<vmem>>, vector<1x128xf32>
    %37 = vector.broadcast %36 : vector<1x128xf32> to vector<64x128xf32>
    %38 = arith.addf %35, %37 : vector<64x128xf32>
    %cst_21 = arith.constant 0.000000e+00 : f32
    %39 = vector.broadcast %cst_21 : f32 to vector<64x128xf32>
    %40 = arith.maximumf %38, %39 : vector<64x128xf32>
    %41 = arith.truncf %40 : vector<64x128xf32> to vector<64x128xbf16>
    %c0_22 = arith.constant 0 : index
    %c0_23 = arith.constant 0 : index
    %42 = vector.load %arg9[%c0_22, %c0_23] : memref<128x128xbf16, #tpu.memory_space<vmem>>, vector<128x128xbf16>
    %cst_24 = arith.constant dense<0.000000e+00> : vector<64x128xf32>
    %43 = tpu.matmul %41, %42, %cst_24 {dimension_numbers = #tpu.dot_dimension_numbers<[1], [0], [0], [1], [0, 0, 1, 1], [], []>} : vector<64x128xbf16>, vector<128x128xbf16>, vector<64x128xf32> -> vector<64x128xf32>
    %c0_25 = arith.constant 0 : index
    %c0_26 = arith.constant 0 : index
    %44 = vector.load %arg10[%c0_25, %c0_26] : memref<1x128xf32, #tpu.memory_space<vmem>>, vector<1x128xf32>
    %45 = vector.broadcast %44 : vector<1x128xf32> to vector<64x128xf32>
    %46 = arith.addf %43, %45 : vector<64x128xf32>
    %c0_27 = arith.constant 0 : index
    %c0_28 = arith.constant 0 : index
    %47 = vector.load %arg11[%c0_27, %c0_28] : memref<64x128xf32, #tpu.memory_space<vmem>>, vector<64x128xf32>
    tpu.vector_store %arg11[%c0_27, %c0_28], %46 {strides = array<i32>} : memref<64x128xf32, #tpu.memory_space<vmem>>, vector<64x128xf32>,
    return
  }
  func.func @transform_0(%arg0: i32) -> (i32, i32) {
    %c0_i32 = arith.constant 0 : i32
    %c0_i32_0 = arith.constant 0 : i32
    return %arg0, %c0_i32 : i32, i32
  }
  func.func @transform_1(%arg0: i32) -> (i32, i32) {
    %c0_i32 = arith.constant 0 : i32
    %c0_i32_0 = arith.constant 0 : i32
    %c0_i32_1 = arith.constant 0 : i32
    return %c0_i32, %c0_i32_0 : i32, i32
  }
  func.func @transform_2(%arg0: i32) -> (i32, i32) {
    %c0_i32 = arith.constant 0 : i32
    %c0_i32_0 = arith.constant 0 : i32
    %c0_i32_1 = arith.constant 0 : i32
    return %c0_i32, %c0_i32_0 : i32, i32
  }
  func.func @transform_3(%arg0: i32) -> (i32, i32) {
    %c0_i32 = arith.constant 0 : i32
    %c0_i32_0 = arith.constant 0 : i32
    %c0_i32_1 = arith.constant 0 : i32
    return %c0_i32, %c0_i32_0 : i32, i32
  }
  func.func @transform_4(%arg0: i32) -> (i32, i32) {
    %c0_i32 = arith.constant 0 : i32
    %c0_i32_0 = arith.constant 0 : i32
    %c0_i32_1 = arith.constant 0 : i32
    return %c0_i32, %c0_i32_0 : i32, i32
  }
  func.func @transform_5(%arg0: i32) -> (i32, i32) {
    %c0_i32 = arith.constant 0 : i32
    %c0_i32_0 = arith.constant 0 : i32
    %c0_i32_1 = arith.constant 0 : i32
    return %c0_i32, %c0_i32_0 : i32, i32
  }
  func.func @transform_6(%arg0: i32) -> (i32, i32) {
    %c0_i32 = arith.constant 0 : i32
    %c0_i32_0 = arith.constant 0 : i32
    %c0_i32_1 = arith.constant 0 : i32
    return %c0_i32, %c0_i32_0 : i32, i32
  }
  func.func @transform_7(%arg0: i32) -> (i32, i32) {
    %c0_i32 = arith.constant 0 : i32
    %c0_i32_0 = arith.constant 0 : i32
    %c0_i32_1 = arith.constant 0 : i32
    return %c0_i32, %c0_i32_0 : i32, i32
  }
  func.func @transform_8(%arg0: i32) -> (i32, i32) {
    %c0_i32 = arith.constant 0 : i32
    %c0_i32_0 = arith.constant 0 : i32
    %c0_i32_1 = arith.constant 0 : i32
    return %c0_i32, %c0_i32_0 : i32, i32
  }
  func.func @transform_9(%arg0: i32) -> (i32, i32) {
    %c0_i32 = arith.constant 0 : i32
    %c0_i32_0 = arith.constant 0 : i32
    %c0_i32_1 = arith.constant 0 : i32
    return %c0_i32, %c0_i32_0 : i32, i32
  }
  func.func @transform_10(%arg0: i32) -> (i32, i32) {
    %c0_i32 = arith.constant 0 : i32
    %c0_i32_0 = arith.constant 0 : i32
    return %arg0, %c0_i32 : i32, i32
  }
}

</mosaic_0001>

<llo_original>
// kernel: tpu_custom_call.1
$region0: #{tpu_custom_call.1}
  #allocation0 [shape = 'u32[]', space=smem, size = 0x4, offset = 0x4, fixed_abs, tag = 'smem constant byte address 0x4 - core index']
  #allocation1 [shape = 'u32[144,128]{1,0:T(1,128)}', space=vmem, size = 0x12000, scoped, tag = 'internal scratch']
  %s0 = inlined_call_operand.vmem [shape: f32[128,1], index: 0, kind: input, shape index: {}]
  %s1 = inlined_call_operand.hbm [shape: f32[8,128], index: 1, kind: input, shape index: {}]
  %s2 = inlined_call_operand.vmem [shape: bf16[128,128], index: 2, kind: input, shape index: {}]
  %s3 = inlined_call_operand.vmem [shape: f32[1,128], index: 3, kind: input, shape index: {}]
  %s4 = inlined_call_operand.vmem [shape: bf16[128,128], index: 4, kind: input, shape index: {}]
  %s5 = inlined_call_operand.vmem [shape: f32[1,128], index: 5, kind: input, shape index: {}]
  %s6 = inlined_call_operand.hbm [shape: bf16[128,128], index: 6, kind: input, shape index: {}]
  %s7 = inlined_call_operand.vmem [shape: f32[1,128], index: 7, kind: input, shape index: {}]
  %s8 = inlined_call_operand.hbm [shape: bf16[128,128], index: 8, kind: input, shape index: {}]
  %s9 = inlined_call_operand.vmem [shape: f32[1,128], index: 9, kind: input, shape index: {}]
  %s10 = inlined_call_operand.hbm [shape: f32[128,128], index: 10, kind: output, shape index: {}]
  %s11 = sld [smem:[#allocation0]]
  $region85: #{tpu_custom_call.1} parent=0
    _
  %s13 = ssub.s32 1, %s11
  %s14 = scalar_select 0, %s13, %s11
  $region1: #{tpu_custom_call.1} parent=0
    #allocation2 [shape = 'u8[4096]{0}', space=vmem, size = 0x1000, scoped, tag = 'input window, operand 1, single buffered']
    #allocation3 [shape = 's32[2]{0}', space=sflag, size = 0x8, scoped, tag = 'scoped memory for tpu_custom_call.1']
    #allocation4 [shape = 's32[2]{0}', space=sflag, size = 0x8, scoped, tag = 'scoped memory for tpu_custom_call.1']
    #allocation5 [shape = 'u8[32768]{0}', space=vmem, size = 0x8000, scoped, tag = 'input window, operand 6, single buffered']
    #allocation6 [shape = 's32[1]{0}', space=sflag, size = 0x4, scoped, tag = 'scoped memory for tpu_custom_call.1']
    #allocation7 [shape = 'u8[32768]{0}', space=vmem, size = 0x8000, scoped, tag = 'input window, operand 8, single buffered']
    #allocation8 [shape = 'u8[65536]{0}', space=vmem, size = 0x10000, scoped, tag = 'output window, operand 0']
    %15 = vsyncpa [#allocation3], 0
    %16 = vsyncpa [#allocation6], 0
    %17 = vsyncpa [#allocation4], 0
    %s18 = scalar_lea.sflag [#allocation4], 1
    %19 = vsyncpa %s18, 0
    loop: start=0, step=1, limit=4
    $region2: #{tpu_custom_call.1} parent=1 // loop_pre_header
      _
    $region3: #{tpu_custom_call.1} parent=1 // loop_header
      %s21 = sphi 0, %s25
      %p22 = scmp.ge.s32.totalorder %s21, 4
      %s31 = sphi 0, %s33
      %s34 = sphi 0, %s31
      %s35 = sphi 0, %s34
      %s51 = sphi 0, %s35
      %s55 = sphi 0, %s55
      %s57 = sphi 0, %s55
      %s58 = sphi 0, %s57
      %s72 = sphi 0, %s58
      %s76 = sphi 0, %s76
      %s78 = sphi 0, %s76
      %s79 = sphi 0, %s78
      %s93 = sphi 0, %s79
      %s97 = sphi 0, %s97
      %s99 = sphi 0, %s97
      %s100 = sphi 0, %s99
      %s114 = sphi 0, %s100
      %s118 = sphi 0, %s118
      %s120 = sphi 0, %s118
      %s121 = sphi 0, %s120
      %s135 = sphi 0, %s121
      %s139 = sphi 0, %s139
      %s141 = sphi 0, %s139
      %s142 = sphi 0, %s141
      %s156 = sphi 0, %s142
      %s160 = sphi 0, %s160
      %s162 = sphi 0, %s160
      %s163 = sphi 0, %s162
      %s177 = sphi 0, %s163
      %s181 = sphi 0, %s181
      %s183 = sphi 0, %s181
      %s184 = sphi 0, %s183
      %s198 = sphi 0, %s184
      %s202 = sphi 0, %s202
      %s204 = sphi 0, %s202
      %s205 = sphi 0, %s204
      %s219 = sphi 0, %s205
      %s223 = sphi 0, %s223
      %s225 = sphi 0, %s223
      %s226 = sphi 0, %s225
      %s240 = sphi 0, %s226
      %s246 = sphi 0, %s248
      %s249 = sphi 0, %s246
      %s250 = sphi 0, %s249
      %s266 = sphi 0, %s250
    $region4: #{tpu_custom_call.1} parent=1 // loop_header_branch
      %24 = sbr.rel (%p22) target = $region8
    $region5: #{tpu_custom_call.1} parent=1 // loop_body
      %s26 = ssub.s32 %s21, 1
      %s27 = ssub.s32 %s21, 2
      %s28 = sadd.s32 %s21, 1
      %s29 = ssub.s32 %s21, %s28
      %p30 = scmp.eq.s32.totalorder %s29, 0
      %s32 = sadd.s32 %s31, 1
      %s33 = scalar_select %p30, %s31, %s32
      %p36 = pneg %p30
      %p37 = scmp.eq.s32.totalorder %s21, 1
      %p38 = por %p36, %p37
      %p39 = scmp.ne.s32.totalorder %s31, %s34
      %p40 = scmp.eq.s32.totalorder %s21, 0
      %p41 = por %p39, %p40
      %p42 = scmp.ne.s32.totalorder %s31, %s34
      %p43 = scmp.eq.s32.totalorder %s26, 1
      %p44 = por %p42, %p43
      %p45 = scmp.ne.s32.totalorder %s34, %s35
      %p46 = scmp.eq.s32.totalorder %s26, 0
      %p47 = por %p45, %p46
      %p48 = scmp.ne.s32.totalorder %s34, %s35
      %p49 = scmp.eq.s32.totalorder %s27, 1
      %p50 = por %p48, %p49
      %p52 = scmp.ne.s32.totalorder %s35, %s51
      %p53 = scmp.eq.s32.totalorder %s27, 0
      %p54 = por %p52, %p53
      %s56 = sadd.s32 %s55, 1
      %p59 = scmp.eq.s32.totalorder %s21, 1
      %p60 = scmp.ne.s32.totalorder %s55, %s57
      %p61 = scmp.eq.s32.totalorder %s21, 0
      %p62 = por %p60, %p61
      %p63 = scmp.ne.s32.totalorder %s55, %s57
      %p64 = scmp.eq.s32.totalorder %s26, 1
      %p65 = por %p63, %p64
      %p66 = scmp.ne.s32.totalorder %s57, %s58
      %p67 = scmp.eq.s32.totalorder %s26, 0
      %p68 = por %p66, %p67
      %p69 = scmp.ne.s32.totalorder %s57, %s58
      %p70 = scmp.eq.s32.totalorder %s27, 1
      %p71 = por %p69, %p70
      %p73 = scmp.ne.s32.totalorder %s58, %s72
      %p74 = scmp.eq.s32.totalorder %s27, 0
      %p75 = por %p73, %p74
      %s77 = sadd.s32 %s76, 1
      %p80 = scmp.eq.s32.totalorder %s21, 1
      %p81 = scmp.ne.s32.totalorder %s76, %s78
      %p82 = scmp.eq.s32.totalorder %s21, 0
      %p83 = por %p81, %p82
      %p84 = scmp.ne.s32.totalorder %s76, %s78
      %p85 = scmp.eq.s32.totalorder %s26, 1
      %p86 = por %p84, %p85
      %p87 = scmp.ne.s32.totalorder %s78, %s79
      %p88 = scmp.eq.s32.totalorder %s26, 0
      %p89 = por %p87, %p88
      %p90 = scmp.ne.s32.totalorder %s78, %s79
      %p91 = scmp.eq.s32.totalorder %s27, 1
      %p92 = por %p90, %p91
      %p94 = scmp.ne.s32.totalorder %s79, %s93
      %p95 = scmp.eq.s32.totalorder %s27, 0
      %p96 = por %p94, %p95
      %s98 = sadd.s32 %s97, 1
      %p101 = scmp.eq.s32.totalorder %s21, 1
      %p102 = scmp.ne.s32.totalorder %s97, %s99
      %p103 = scmp.eq.s32.totalorder %s21, 0
      %p104 = por %p102, %p103
      %p105 = scmp.ne.s32.totalorder %s97, %s99
      %p106 = scmp.eq.s32.totalorder %s26, 1
      %p107 = por %p105, %p106
      %p108 = scmp.ne.s32.totalorder %s99, %s100
      %p109 = scmp.eq.s32.totalorder %s26, 0
      %p110 = por %p108, %p109
      %p111 = scmp.ne.s32.totalorder %s99, %s100
      %p112 = scmp.eq.s32.totalorder %s27, 1
      %p113 = por %p111, %p112
      %p115 = scmp.ne.s32.totalorder %s100, %s114
      %p116 = scmp.eq.s32.totalorder %s27, 0
      %p117 = por %p115, %p116
      %s119 = sadd.s32 %s118, 1
      %p122 = scmp.eq.s32.totalorder %s21, 1
      %p123 = scmp.ne.s32.totalorder %s118, %s120
      %p124 = scmp.eq.s32.totalorder %s21, 0
      %p125 = por %p123, %p124
      %p126 = scmp.ne.s32.totalorder %s118, %s120
      %p127 = scmp.eq.s32.totalorder %s26, 1
      %p128 = por %p126, %p127
      %p129 = scmp.ne.s32.totalorder %s120, %s121
      %p130 = scmp.eq.s32.totalorder %s26, 0
      %p131 = por %p129, %p130
      %p132 = scmp.ne.s32.totalorder %s120, %s121
      %p133 = scmp.eq.s32.totalorder %s27, 1
      %p134 = por %p132, %p133
      %p136 = scmp.ne.s32.totalorder %s121, %s135
      %p137 = scmp.eq.s32.totalorder %s27, 0
      %p138 = por %p136, %p137
      %s140 = sadd.s32 %s139, 1
      %p143 = scmp.eq.s32.totalorder %s21, 1
      %p144 = scmp.ne.s32.totalorder %s139, %s141
      %p145 = scmp.eq.s32.totalorder %s21, 0
      %p146 = por %p144, %p145
      %p147 = scmp.ne.s32.totalorder %s139, %s141
      %p148 = scmp.eq.s32.totalorder %s26, 1
      %p149 = por %p147, %p148
      %p150 = scmp.ne.s32.totalorder %s141, %s142
      %p151 = scmp.eq.s32.totalorder %s26, 0
      %p152 = por %p150, %p151
      %p153 = scmp.ne.s32.totalorder %s141, %s142
      %p154 = scmp.eq.s32.totalorder %s27, 1
      %p155 = por %p153, %p154
      %p157 = scmp.ne.s32.totalorder %s142, %s156
      %p158 = scmp.eq.s32.totalorder %s27, 0
      %p159 = por %p157, %p158
      %s161 = sadd.s32 %s160, 1
      %p164 = scmp.eq.s32.totalorder %s21, 1
      %p165 = scmp.ne.s32.totalorder %s160, %s162
      %p166 = scmp.eq.s32.totalorder %s21, 0
      %p167 = por %p165, %p166
      %p168 = scmp.ne.s32.totalorder %s160, %s162
      %p169 = scmp.eq.s32.totalorder %s26, 1
      %p170 = por %p168, %p169
      %p171 = scmp.ne.s32.totalorder %s162, %s163
      %p172 = scmp.eq.s32.totalorder %s26, 0
      %p173 = por %p171, %p172
      %p174 = scmp.ne.s32.totalorder %s162, %s163
      %p175 = scmp.eq.s32.totalorder %s27, 1
      %p176 = por %p174, %p175
      %p178 = scmp.ne.s32.totalorder %s163, %s177
      %p179 = scmp.eq.s32.totalorder %s27, 0
      %p180 = por %p178, %p179
      %s182 = sadd.s32 %s181, 1
      %p185 = scmp.eq.s32.totalorder %s21, 1
      %p186 = scmp.ne.s32.totalorder %s181, %s183
      %p187 = scmp.eq.s32.totalorder %s21, 0
      %p188 = por %p186, %p187
      %p189 = scmp.ne.s32.totalorder %s181, %s183
      %p190 = scmp.eq.s32.totalorder %s26, 1
      %p191 = por %p189, %p190
      %p192 = scmp.ne.s32.totalorder %s183, %s184
      %p193 = scmp.eq.s32.totalorder %s26, 0
      %p194 = por %p192, %p193
      %p195 = scmp.ne.s32.totalorder %s183, %s184
      %p196 = scmp.eq.s32.totalorder %s27, 1
      %p197 = por %p195, %p196
      %p199 = scmp.ne.s32.totalorder %s184, %s198
      %p200 = scmp.eq.s32.totalorder %s27, 0
      %p201 = por %p199, %p200
      %s203 = sadd.s32 %s202, 1
      %p206 = scmp.eq.s32.totalorder %s21, 1
      %p207 = scmp.ne.s32.totalorder %s202, %s204
      %p208 = scmp.eq.s32.totalorder %s21, 0
      %p209 = por %p207, %p208
      %p210 = scmp.ne.s32.totalorder %s202, %s204
      %p211 = scmp.eq.s32.totalorder %s26, 1
      %p212 = por %p210, %p211
      %p213 = scmp.ne.s32.totalorder %s204, %s205
      %p214 = scmp.eq.s32.totalorder %s26, 0
      %p215 = por %p213, %p214
      %p216 = scmp.ne.s32.totalorder %s204, %s205
      %p217 = scmp.eq.s32.totalorder %s27, 1
      %p218 = por %p216, %p217
      %p220 = scmp.ne.s32.totalorder %s205, %s219
      %p221 = scmp.eq.s32.totalorder %s27, 0
      %p222 = por %p220, %p221
      %s224 = sadd.s32 %s223, 1
      %p227 = scmp.eq.s32.totalorder %s21, 1
      %p228 = scmp.ne.s32.totalorder %s223, %s225
      %p229 = scmp.eq.s32.totalorder %s21, 0
      %p230 = por %p228, %p229
      %p231 = scmp.ne.s32.totalorder %s223, %s225
      %p232 = scmp.eq.s32.totalorder %s26, 1
      %p233 = por %p231, %p232
      %p234 = scmp.ne.s32.totalorder %s225, %s226
      %p235 = scmp.eq.s32.totalorder %s26, 0
      %p236 = por %p234, %p235
      %p237 = scmp.ne.s32.totalorder %s225, %s226
      %p238 = scmp.eq.s32.totalorder %s27, 1
      %p239 = por %p237, %p238
      %p241 = scmp.ne.s32.totalorder %s226, %s240
      %p242 = scmp.eq.s32.totalorder %s27, 0
      %p243 = por %p241, %p242
      %s244 = ssub.s32 %s21, %s28
      %p245 = scmp.eq.s32.totalorder %s244, 0
      %s247 = sadd.s32 %s246, 1
      %s248 = scalar_select %p245, %s246, %s247
      %p251 = pneg %p245
      %p252 = scmp.eq.s32.totalorder %s21, 1
      %p253 = por %p251, %p252
      %p254 = scmp.ne.s32.totalorder %s246, %s249
      %p255 = scmp.eq.s32.totalorder %s21, 0
      %p256 = por %p254, %p255
      %p257 = scmp.ne.s32.totalorder %s246, %s249
      %p258 = scmp.eq.s32.totalorder %s26, 1
      %p259 = por %p257, %p258
      %p260 = scmp.ne.s32.totalorder %s249, %s250
      %p261 = scmp.eq.s32.totalorder %s26, 0
      %p262 = por %p260, %p261
      %p263 = scmp.ne.s32.totalorder %s249, %s250
      %p264 = scmp.eq.s32.totalorder %s27, 1
      %p265 = por %p263, %p264
      %p267 = scmp.ne.s32.totalorder %s250, %s266
      %p268 = scmp.eq.s32.totalorder %s27, 0
      %p269 = por %p267, %p268
      %p270 = scmp.le.s32.totalorder 1, %s21
      %p271 = scmp.lt.s32.totalorder %s21, 3
      %p272 = pnand %p270, %p271
      %p273 = pneg %p272
      // Predicated region
      $region9: #{tpu_custom_call.1} parent=5 // pred_check
        _
      $region10: #{tpu_custom_call.1} parent=5 // pred_check_branch
        %275 = sbr.rel (%p272) target = $region12
      $region11: #{tpu_custom_call.1} parent=5 // pred_region
        %s276 = ssub.s32 %s21, 1
        // Predicated region
        $region13: #{tpu_custom_call.1} parent=11 // pred_check
          %p277 = pneg %p68
        $region14: #{tpu_custom_call.1} parent=11 // pred_check_branch
          %279 = sbr.rel (%p277) target = $region16
        $region15: #{tpu_custom_call.1} parent=11 // pred_region
          %s281 = ssub.s32 128, 128
          %282 = vsyncadd [#allocation3], %s281
          %s284 = sshll.u32 [#allocation2], 4
          %s285 = int_to_ptr.vmem [resolvable:$true] %s284
          %287 = dma.hbm_to_vmem [thread:$0]  %s1, 128, %s285, [#allocation3]
        $region16: #{tpu_custom_call.1} parent=11 // pred_fallthru
          _
        // Predicated region
        $region17: #{tpu_custom_call.1} parent=11 // pred_check
          %p288 = pneg %p89
        $region18: #{tpu_custom_call.1} parent=11 // pred_check_branch
          %290 = sbr.rel (%p288) target = $region20
        $region19: #{tpu_custom_call.1} parent=11 // pred_region
          _
        $region20: #{tpu_custom_call.1} parent=11 // pred_fallthru
          _
        // Predicated region
        $region21: #{tpu_custom_call.1} parent=11 // pred_check
          %p291 = pneg %p110
        $region22: #{tpu_custom_call.1} parent=11 // pred_check_branch
          %293 = sbr.rel (%p291) target = $region24
        $region23: #{tpu_custom_call.1} parent=11 // pred_region
          _
        $region24: #{tpu_custom_call.1} parent=11 // pred_fallthru
          _
        // Predicated region
        $region25: #{tpu_custom_call.1} parent=11 // pred_check
          %p294 = pneg %p131
        $region26: #{tpu_custom_call.1} parent=11 // pred_check_branch
          %296 = sbr.rel (%p294) target = $region28
        $region27: #{tpu_custom_call.1} parent=11 // pred_region
          _
        $region28: #{tpu_custom_call.1} parent=11 // pred_fallthru
          _
        // Predicated region
        $region29: #{tpu_custom_call.1} parent=11 // pred_check
          %p297 = pneg %p152
        $region30: #{tpu_custom_call.1} parent=11 // pred_check_branch
          %299 = sbr.rel (%p297) target = $region32
        $region31: #{tpu_custom_call.1} parent=11 // pred_region
          _
        $region32: #{tpu_custom_call.1} parent=11 // pred_fallthru
          _
        // Predicated region
        $region33: #{tpu_custom_call.1} parent=11 // pred_check
          %p300 = pneg %p173
        $region34: #{tpu_custom_call.1} parent=11 // pred_check_branch
          %302 = sbr.rel (%p300) target = $region36
        $region35: #{tpu_custom_call.1} parent=11 // pred_region
          %s304 = ssub.s32 1024, 1024
          %305 = vsyncadd [#allocation6], %s304
          %s306 = sshll.u32 [#allocation5], 4
          %s307 = int_to_ptr.vmem [resolvable:$true] %s306
          %312 = dma.hbm_to_vmem [thread:$0]  %s6, 1024, %s307, [#allocation6], 64, 64, 4
        $region36: #{tpu_custom_call.1} parent=11 // pred_fallthru
          _
        // Predicated region
        $region37: #{tpu_custom_call.1} parent=11 // pred_check
          %p313 = pneg %p194
        $region38: #{tpu_custom_call.1} parent=11 // pred_check_branch
          %315 = sbr.rel (%p313) target = $region40
        $region39: #{tpu_custom_call.1} parent=11 // pred_region
          _
        $region40: #{tpu_custom_call.1} parent=11 // pred_fallthru
          _
        // Predicated region
        $region41: #{tpu_custom_call.1} parent=11 // pred_check
          %p316 = pneg %p215
        $region42: #{tpu_custom_call.1} parent=11 // pred_check_branch
          %318 = sbr.rel (%p316) target = $region44
        $region43: #{tpu_custom_call.1} parent=11 // pred_region
          %s320 = ssub.s32 1024, 1024
          %321 = vsyncadd [#allocation6], %s320
          %s322 = sshll.u32 [#allocation7], 4
          %s323 = int_to_ptr.vmem [resolvable:$true] %s322
          %328 = dma.hbm_to_vmem [thread:$0]  %s8, 1024, %s323, [#allocation6], 64, 64, 4
        $region44: #{tpu_custom_call.1} parent=11 // pred_fallthru
          _
        // Predicated region
        $region45: #{tpu_custom_call.1} parent=11 // pred_check
          %p329 = pneg %p236
        $region46: #{tpu_custom_call.1} parent=11 // pred_check_branch
          %331 = sbr.rel (%p329) target = $region48
        $region47: #{tpu_custom_call.1} parent=11 // pred_region
          _
        $region48: #{tpu_custom_call.1} parent=11 // pred_fallthru
          _
      $region12: #{tpu_custom_call.1} parent=5 // pred_fallthru
        _
      %p332 = scmp.lt.s32.totalorder %s21, 2
      // Predicated region
      $region49: #{tpu_custom_call.1} parent=5 // pred_check
        %p333 = pneg %p332
      $region50: #{tpu_custom_call.1} parent=5 // pred_check_branch
        %335 = sbr.rel (%p333) target = $region52
      $region51: #{tpu_custom_call.1} parent=5 // pred_region
        // Predicated region
        $region53: #{tpu_custom_call.1} parent=51 // pred_check
          %p336 = pneg %p41
        $region54: #{tpu_custom_call.1} parent=51 // pred_check_branch
          %338 = sbr.rel (%p336) target = $region56
        $region55: #{tpu_custom_call.1} parent=51 // pred_region
          %s339 = smul.u32 8, %s21
          %p340 = scmp.lt.s32.totalorder %s339, 15
          %s341 = scalar_select %p340, %s339, 15
          %s342 = smul.addr %s341, 8
          %s343 = scalar_lea.vmem %s0, %s342
          %s344 = smul.u32 8, %s21
        $region56: #{tpu_custom_call.1} parent=51 // pred_fallthru
          _
      $region52: #{tpu_custom_call.1} parent=5 // pred_fallthru
        _
      %p345 = scmp.le.s32.totalorder 1, %s21
      %p346 = scmp.lt.s32.totalorder %s21, 3
      %p347 = pnand %p345, %p346
      %p348 = pneg %p347
      // Predicated region
      $region57: #{tpu_custom_call.1} parent=5 // pred_check
        _
      $region58: #{tpu_custom_call.1} parent=5 // pred_check_branch
        %350 = sbr.rel (%p347) target = $region60
      $region59: #{tpu_custom_call.1} parent=5 // pred_region
        %s351 = ssub.s32 %s21, 1
        // Predicated region
        $region61: #{tpu_custom_call.1} parent=59 // pred_check
          %p352 = pneg %p68
        $region62: #{tpu_custom_call.1} parent=59 // pred_check_branch
          %354 = sbr.rel (%p352) target = $region64
        $region63: #{tpu_custom_call.1} parent=59 // pred_region
          %355 = dma.done [#allocation3], 128
        $region64: #{tpu_custom_call.1} parent=59 // pred_fallthru
          _
        // Predicated region
        $region65: #{tpu_custom_call.1} parent=59 // pred_check
          %p356 = pneg %p173
        $region66: #{tpu_custom_call.1} parent=59 // pred_check_branch
          %358 = sbr.rel (%p356) target = $region68
        $region67: #{tpu_custom_call.1} parent=59 // pred_region
          %359 = dma.done [#allocation6], 1024
        $region68: #{tpu_custom_call.1} parent=59 // pred_fallthru
          _
        // Predicated region
        $region69: #{tpu_custom_call.1} parent=59 // pred_check
          %p360 = pneg %p215
        $region70: #{tpu_custom_call.1} parent=59 // pred_check_branch
          %362 = sbr.rel (%p360) target = $region72
        $region71: #{tpu_custom_call.1} parent=59 // pred_region
          %363 = dma.done [#allocation6], 1024
        $region72: #{tpu_custom_call.1} parent=59 // pred_fallthru
          _
        %s364 = smul.u32 8, %s26
        %p365 = scmp.lt.s32.totalorder %s364, 15
        %s366 = scalar_select %p365, %s364, 15
        %s367 = smul.addr %s366, 8
        %s368 = scalar_lea.vmem %s0, %s367
        %p369 = pneg %p47
        %p370 = pneg %p44
        %p371 = pneg %p68
        %p372 = pneg %p65
        %p373 = pneg %p89
        %p374 = pneg %p86
        %p375 = pneg %p110
        %p376 = pneg %p107
        %p377 = pneg %p131
        %p378 = pneg %p128
        %p379 = pneg %p152
        %p380 = pneg %p149
        %p381 = pneg %p173
        %p382 = pneg %p170
        %p383 = pneg %p194
        %p384 = pneg %p191
        %p385 = pneg %p215
        %p386 = pneg %p212
        %p387 = pneg %p236
        %p388 = pneg %p233
        %p389 = pneg %p262
        %p390 = pneg %p259
        %s391 = sand.u32 %s249, 1
        %s392 = scalar_lea.sflag [#allocation4], %s391
        %s393 = sand.u32 %s249, 1
        %s394 = smul.addr %s393, 64
        %s395 = scalar_lea.vmem [#allocation8], %s394
        %s396 = smul.u32 8, %s26
        %p397 = scmp.lt.s32.totalorder %s396, 15
        %s398 = scalar_select %p397, %s396, 15
        %s399 = smul.addr %s398, 8
        %s400 = scalar_lea.vmem %s0, %s399
        %s401 = smul.u32 8, %s26
        %s402 = smul.u32 8, %s26
        %v404 = vld [vmem:[%s400] sm:$0xff]
        %v405 = vld [vmem:[%s400 + $0x8] sm:$0xff]
        %v406 = vld [vmem:[%s400 + $0x10] sm:$0xff]
        %v407 = vld [vmem:[%s400 + $0x18] sm:$0xff]
        %v408 = vld [vmem:[%s400 + $0x20] sm:$0xff]
        %v409 = vld [vmem:[%s400 + $0x28] sm:$0xff]
        %v410 = vld [vmem:[%s400 + $0x30] sm:$0xff]
        %v411 = vld [vmem:[%s400 + $0x38] sm:$0xff]
        %v412 = vlaneseq
        %v413 = vand.u32 %v412, 127
        %v414 = vcvt.s32.f32 %v413
        %v415 = vadd.f32 %v414, 1.0
        %v416 = vmul.f32 %v415, 3.1415927
        %418 = vset.pattern.permute.xlu0 0
        %419 = vperm.xlu0 %418, %v404
        %v420 = vpop.permute.xlu0 %419
        %423 = vset.pattern.permute.xlu0 0
        %424 = vperm.xlu0 %423, %v405
        %v425 = vpop.permute.xlu0 %424
        %428 = vset.pattern.permute.xlu0 0
        %429 = vperm.xlu0 %428, %v406
        %v430 = vpop.permute.xlu0 %429
        %433 = vset.pattern.permute.xlu0 0
        %434 = vperm.xlu0 %433, %v407
        %v435 = vpop.permute.xlu0 %434
        %438 = vset.pattern.permute.xlu0 0
        %439 = vperm.xlu0 %438, %v408
        %v440 = vpop.permute.xlu0 %439
        %443 = vset.pattern.permute.xlu0 0
        %444 = vperm.xlu0 %443, %v409
        %v445 = vpop.permute.xlu0 %444
        %448 = vset.pattern.permute.xlu0 0
        %449 = vperm.xlu0 %448, %v410
        %v450 = vpop.permute.xlu0 %449
        %453 = vset.pattern.permute.xlu0 0
        %454 = vperm.xlu0 %453, %v411
        %v455 = vpop.permute.xlu0 %454
        %v457 = vmul.f32 %v420, %v416
        %v458 = vmul.f32 %v425, %v416
        %v459 = vmul.f32 %v430, %v416
        %v460 = vmul.f32 %v435, %v416
        %v461 = vmul.f32 %v440, %v416
        %v462 = vmul.f32 %v445, %v416
        %v463 = vmul.f32 %v450, %v416
        %v464 = vmul.f32 %v455, %v416
        %v465 = vand.u32 2147483647, %v457
        %vm466 = vcmp.le.f32.partialorder %v465, 0.7853982
        %vm467 = vcmp.lt.s32.totalorder %v457, 0
        %v468 = vand.u32 %v457, 2139095040
        %v469 = vshrl.u32 %v468, 23
        %v470 = vsub.s32 %v469, 127
        %v471 = vand.u32 2147483647, %v457
        %v472 = vand.u32 %v471, 8388607
        %v473 = vor.u32 %v472, 8388608
        %v474 = vsub.s32 0, %v473
        %v475 = vadd.s32 %v470, 1
        %vm476 = vcmp.gt.s32.totalorder %v475, 0
        %v477 = vsel %vm476, %v475, 0
        %v478 = vshrl.u32 %v477, 5
        %v479 = vand.u32 %v477, 31
        %v480 = vsub.s32 32, %v479
        %v481 = vshrl.u32 683565275, %v480
        %v482 = vshll.u32 683565275, %v479
        %v483 = vshrl.u32 2475754826, %v480
        %v484 = vor.u32 %v482, %v483
        %v485 = vshll.u32 2475754826, %v479
        %v486 = vshrl.u32 2131351028, %v480
        %v487 = vor.u32 %v485, %v486
        %v488 = vshll.u32 2131351028, %v479
        %v489 = vshrl.u32 2102212464, %v480
        %v490 = vor.u32 %v488, %v489
        %v491 = vshll.u32 2102212464, %v479
        %v492 = vshrl.u32 920167782, %v480
        %v493 = vor.u32 %v491, %v492
        %v494 = vshll.u32 920167782, %v479
        %v495 = vshrl.u32 1326507024, %v480
        %v496 = vor.u32 %v494, %v495
        %vm497 = vcmp.lt.s32.totalorder %v478, 1
        %vm498 = vcmp.lt.s32.totalorder %v478, 2
        %vm499 = vcmp.lt.s32.totalorder %v478, 3
        %vm500 = vcmp.lt.s32.totalorder %v478, 4
        %v501 = vsel %vm497, %v481, %v484
        %v502 = vsel %vm500, %v490, 2102212464
        %v503 = vsel %vm499, %v487, %v502
        %v504 = vsel %vm498, %v501, %v503
        %v505 = vsel %vm497, %v484, %v487
        %v506 = vsel %vm500, %v493, 920167782
        %v507 = vsel %vm499, %v490, %v506
        %v508 = vsel %vm498, %v505, %v507
        %v509 = vsel %vm497, %v487, %v490
        %v510 = vsel %vm500, %v496, 1326507024
        %v511 = vsel %vm499, %v493, %v510
        %v512 = vsel %vm498, %v509, %v511
        %v513 = vshll.u32 %v473, 8
        %v514 = vmul.u32.u64.compose %v513, %v512
        %v515 = vextract.low.u32 %v514
        %v516 = vextract.high.u32 %v514
        %v517 = vmul.u32.u64.compose %v513, %v508
        %v518 = vextract.low.u32 %v517
        %v519 = vextract.high.u32 %v517
        %v520 = vmul.u32 %v513, %v504
        %v521 = vadd.s32 %v516, %v518
        %vm522 = vc.u32 %v516, %v518
        %v523 = vadd.s32 %v519, 1
        %v524 = vsel %vm522, %v523, %v519
        %v525 = vadd.s32 %v520, %v524
        %v526 = vadd.s32 %v525, 536870912
        %v527 = vshrl.u32 %v526, 30
        %v528 = vshll.u32 %v527, 30
        %v529 = vsub.s32 %v525, %v528
        %vm530 = vcmp.lt.s32.totalorder %v529, 0
        %v531 = vsub.s32 0, %v529
        %v532 = vsel %vm530, %v531, %v529
        %v533 = vclz %v532
        %v534 = vsub.s32 %v533, 2
        %vm535 = vcmp.gt.s32.totalorder 0, %v534
        %v536 = vsel %vm535, 0, %v534
        %v537 = vsub.s32 32, %v536
        %v538 = vshll.u32 %v529, %v536
        %v539 = vshrl.u32 %v521, %v537
        %v540 = vor.u32 %v538, %v539
        %v541 = vsub.s32 4294967266, %v536
        %v542 = vadd.s32 %v541, 127
        %v543 = vshll.u32 %v542, 23
        %v544 = vor.u32 4788187, %v543
        %v545 = vand.u32 2147483647, %v544
        %v547 = vcvt.s32.f32 %v540
        %v548 = vmul.f32 %v547, %v545
        %v549 = vxor.u32 %v548, 2147483648
        %v550 = vsel %vm467, %v549, %v548
        %v551 = vsub.s32 4, %v527
        %v552 = vsel %vm467, %v551, %v527
        %v553 = vsel %vm466, %v457, %v550
        %v554 = vsel %vm466, 0, %v552
        %v555 = vcosq.f32.pop %v553
        %v556 = vsinq.f32.pop %v553
        %vm557 = vweird.f32 %v457
        %v558 = vand.u32 %v554, 3
        %vm559 = vcmp.lt.s32.totalorder %v558, 2
        %vm560 = vcmp.eq.s32.totalorder %v558, 0
        %v561 = vxor.u32 %v556, 2147483648
        %v562 = vsel %vm560, %v555, %v561
        %vm563 = vcmp.eq.s32.totalorder %v558, 2
        %v564 = vxor.u32 %v555, 2147483648
        %v565 = vsel %vm563, %v564, %v556
        %v566 = vsel %vm559, %v562, %v565
        %v567 = vsel %vm557, nan, %v566
        %v568 = vand.u32 2147483647, %v458
        %vm569 = vcmp.le.f32.partialorder %v568, 0.7853982
        %vm570 = vcmp.lt.s32.totalorder %v458, 0
        %v571 = vand.u32 %v458, 2139095040
        %v572 = vshrl.u32 %v571, 23
        %v573 = vsub.s32 %v572, 127
        %v574 = vand.u32 2147483647, %v458
        %v575 = vand.u32 %v574, 8388607
        %v576 = vor.u32 %v575, 8388608
        %v577 = vsub.s32 0, %v576
        %v578 = vadd.s32 %v573, 1
        %vm579 = vcmp.gt.s32.totalorder %v578, 0
        %v580 = vsel %vm579, %v578, 0
        %v581 = vshrl.u32 %v580, 5
        %v582 = vand.u32 %v580, 31
        %v583 = vsub.s32 32, %v582
        %v584 = vshrl.u32 683565275, %v583
        %v585 = vshll.u32 683565275, %v582
        %v586 = vshrl.u32 2475754826, %v583
        %v587 = vor.u32 %v585, %v586
        %v588 = vshll.u32 2475754826, %v582
        %v589 = vshrl.u32 2131351028, %v583
        %v590 = vor.u32 %v588, %v589
        %v591 = vshll.u32 2131351028, %v582
        %v592 = vshrl.u32 2102212464, %v583
        %v593 = vor.u32 %v591, %v592
        %v594 = vshll.u32 2102212464, %v582
        %v595 = vshrl.u32 920167782, %v583
        %v596 = vor.u32 %v594, %v595
        %v597 = vshll.u32 920167782, %v582
        %v598 = vshrl.u32 1326507024, %v583
        %v599 = vor.u32 %v597, %v598
        %vm600 = vcmp.lt.s32.totalorder %v581, 1
        %vm601 = vcmp.lt.s32.totalorder %v581, 2
        %vm602 = vcmp.lt.s32.totalorder %v581, 3
        %vm603 = vcmp.lt.s32.totalorder %v581, 4
        %v604 = vsel %vm600, %v584, %v587
        %v605 = vsel %vm603, %v593, 2102212464
        %v606 = vsel %vm602, %v590, %v605
        %v607 = vsel %vm601, %v604, %v606
        %v608 = vsel %vm600, %v587, %v590
        %v609 = vsel %vm603, %v596, 920167782
        %v610 = vsel %vm602, %v593, %v609
        %v611 = vsel %vm601, %v608, %v610
        %v612 = vsel %vm600, %v590, %v593
        %v613 = vsel %vm603, %v599, 1326507024
        %v614 = vsel %vm602, %v596, %v613
        %v615 = vsel %vm601, %v612, %v614
        %v616 = vshll.u32 %v576, 8
        %v617 = vmul.u32.u64.compose %v616, %v615
        %v618 = vextract.low.u32 %v617
        %v619 = vextract.high.u32 %v617
        %v620 = vmul.u32.u64.compose %v616, %v611
        %v621 = vextract.low.u32 %v620
        %v622 = vextract.high.u32 %v620
        %v623 = vmul.u32 %v616, %v607
        %v624 = vadd.s32 %v619, %v621
        %vm625 = vc.u32 %v619, %v621
        %v626 = vadd.s32 %v622, 1
        %v627 = vsel %vm625, %v626, %v622
        %v628 = vadd.s32 %v623, %v627
        %v629 = vadd.s32 %v628, 536870912
        %v630 = vshrl.u32 %v629, 30
        %v631 = vshll.u32 %v630, 30
        %v632 = vsub.s32 %v628, %v631
        %vm633 = vcmp.lt.s32.totalorder %v632, 0
        %v634 = vsub.s32 0, %v632
        %v635 = vsel %vm633, %v634, %v632
        %v636 = vclz %v635
        %v637 = vsub.s32 %v636, 2
        %vm638 = vcmp.gt.s32.totalorder 0, %v637
        %v639 = vsel %vm638, 0, %v637
        %v640 = vsub.s32 32, %v639
        %v641 = vshll.u32 %v632, %v639
        %v642 = vshrl.u32 %v624, %v640
        %v643 = vor.u32 %v641, %v642
        %v644 = vsub.s32 4294967266, %v639
        %v645 = vadd.s32 %v644, 127
        %v646 = vshll.u32 %v645, 23
        %v647 = vor.u32 4788187, %v646
        %v648 = vand.u32 2147483647, %v647
        %v650 = vcvt.s32.f32 %v643
        %v651 = vmul.f32 %v650, %v648
        %v652 = vxor.u32 %v651, 2147483648
        %v653 = vsel %vm570, %v652, %v651
        %v654 = vsub.s32 4, %v630
        %v655 = vsel %vm570, %v654, %v630
        %v656 = vsel %vm569, %v458, %v653
        %v657 = vsel %vm569, 0, %v655
        %v658 = vcosq.f32.pop %v656
        %v659 = vsinq.f32.pop %v656
        %vm660 = vweird.f32 %v458
        %v661 = vand.u32 %v657, 3
        %vm662 = vcmp.lt.s32.totalorder %v661, 2
        %vm663 = vcmp.eq.s32.totalorder %v661, 0
        %v664 = vxor.u32 %v659, 2147483648
        %v665 = vsel %vm663, %v658, %v664
        %vm666 = vcmp.eq.s32.totalorder %v661, 2
        %v667 = vxor.u32 %v658, 2147483648
        %v668 = vsel %vm666, %v667, %v659
        %v669 = vsel %vm662, %v665, %v668
        %v670 = vsel %vm660, nan, %v669
        %v671 = vand.u32 2147483647, %v459
        %vm672 = vcmp.le.f32.partialorder %v671, 0.7853982
        %vm673 = vcmp.lt.s32.totalorder %v459, 0
        %v674 = vand.u32 %v459, 2139095040
        %v675 = vshrl.u32 %v674, 23
        %v676 = vsub.s32 %v675, 127
        %v677 = vand.u32 2147483647, %v459
        %v678 = vand.u32 %v677, 8388607
        %v679 = vor.u32 %v678, 8388608
        %v680 = vsub.s32 0, %v679
        %v681 = vadd.s32 %v676, 1
        %vm682 = vcmp.gt.s32.totalorder %v681, 0
        %v683 = vsel %vm682, %v681, 0
        %v684 = vshrl.u32 %v683, 5
        %v685 = vand.u32 %v683, 31
        %v686 = vsub.s32 32, %v685
        %v687 = vshrl.u32 683565275, %v686
        %v688 = vshll.u32 683565275, %v685
        %v689 = vshrl.u32 2475754826, %v686
        %v690 = vor.u32 %v688, %v689
        %v691 = vshll.u32 2475754826, %v685
        %v692 = vshrl.u32 2131351028, %v686
        %v693 = vor.u32 %v691, %v692
        %v694 = vshll.u32 2131351028, %v685
        %v695 = vshrl.u32 2102212464, %v686
        %v696 = vor.u32 %v694, %v695
        %v697 = vshll.u32 2102212464, %v685
        %v698 = vshrl.u32 920167782, %v686
        %v699 = vor.u32 %v697, %v698
        %v700 = vshll.u32 920167782, %v685
        %v701 = vshrl.u32 1326507024, %v686
        %v702 = vor.u32 %v700, %v701
        %vm703 = vcmp.lt.s32.totalorder %v684, 1
        %vm704 = vcmp.lt.s32.totalorder %v684, 2
        %vm705 = vcmp.lt.s32.totalorder %v684, 3
        %vm706 = vcmp.lt.s32.totalorder %v684, 4
        %v707 = vsel %vm703, %v687, %v690
        %v708 = vsel %vm706, %v696, 2102212464
        %v709 = vsel %vm705, %v693, %v708
        %v710 = vsel %vm704, %v707, %v709
        %v711 = vsel %vm703, %v690, %v693
        %v712 = vsel %vm706, %v699, 920167782
        %v713 = vsel %vm705, %v696, %v712
        %v714 = vsel %vm704, %v711, %v713
        %v715 = vsel %vm703, %v693, %v696
        %v716 = vsel %vm706, %v702, 1326507024
        %v717 = vsel %vm705, %v699, %v716
        %v718 = vsel %vm704, %v715, %v717
        %v719 = vshll.u32 %v679, 8
        %v720 = vmul.u32.u64.compose %v719, %v718
        %v721 = vextract.low.u32 %v720
        %v722 = vextract.high.u32 %v720
        %v723 = vmul.u32.u64.compose %v719, %v714
        %v724 = vextract.low.u32 %v723
        %v725 = vextract.high.u32 %v723
        %v726 = vmul.u32 %v719, %v710
        %v727 = vadd.s32 %v722, %v724
        %vm728 = vc.u32 %v722, %v724
        %v729 = vadd.s32 %v725, 1
        %v730 = vsel %vm728, %v729, %v725
        %v731 = vadd.s32 %v726, %v730
        %v732 = vadd.s32 %v731, 536870912
        %v733 = vshrl.u32 %v732, 30
        %v734 = vshll.u32 %v733, 30
        %v735 = vsub.s32 %v731, %v734
        %vm736 = vcmp.lt.s32.totalorder %v735, 0
        %v737 = vsub.s32 0, %v735
        %v738 = vsel %vm736, %v737, %v735
        %v739 = vclz %v738
        %v740 = vsub.s32 %v739, 2
        %vm741 = vcmp.gt.s32.totalorder 0, %v740
        %v742 = vsel %vm741, 0, %v740
        %v743 = vsub.s32 32, %v742
        %v744 = vshll.u32 %v735, %v742
        %v745 = vshrl.u32 %v727, %v743
        %v746 = vor.u32 %v744, %v745
        %v747 = vsub.s32 4294967266, %v742
        %v748 = vadd.s32 %v747, 127
        %v749 = vshll.u32 %v748, 23
        %v750 = vor.u32 4788187, %v749
        %v751 = vand.u32 2147483647, %v750
        %v753 = vcvt.s32.f32 %v746
        %v754 = vmul.f32 %v753, %v751
        %v755 = vxor.u32 %v754, 2147483648
        %v756 = vsel %vm673, %v755, %v754
        %v757 = vsub.s32 4, %v733
        %v758 = vsel %vm673, %v757, %v733
        %v759 = vsel %vm672, %v459, %v756
        %v760 = vsel %vm672, 0, %v758
        %v761 = vcosq.f32.pop %v759
        %v762 = vsinq.f32.pop %v759
        %vm763 = vweird.f32 %v459
        %v764 = vand.u32 %v760, 3
        %vm765 = vcmp.lt.s32.totalorder %v764, 2
        %vm766 = vcmp.eq.s32.totalorder %v764, 0
        %v767 = vxor.u32 %v762, 2147483648
        %v768 = vsel %vm766, %v761, %v767
        %vm769 = vcmp.eq.s32.totalorder %v764, 2
        %v770 = vxor.u32 %v761, 2147483648
        %v771 = vsel %vm769, %v770, %v762
        %v772 = vsel %vm765, %v768, %v771
        %v773 = vsel %vm763, nan, %v772
        %v774 = vand.u32 2147483647, %v460
        %vm775 = vcmp.le.f32.partialorder %v774, 0.7853982
        %vm776 = vcmp.lt.s32.totalorder %v460, 0
        %v777 = vand.u32 %v460, 2139095040
        %v778 = vshrl.u32 %v777, 23
        %v779 = vsub.s32 %v778, 127
        %v780 = vand.u32 2147483647, %v460
        %v781 = vand.u32 %v780, 8388607
        %v782 = vor.u32 %v781, 8388608
        %v783 = vsub.s32 0, %v782
        %v784 = vadd.s32 %v779, 1
        %vm785 = vcmp.gt.s32.totalorder %v784, 0
        %v786 = vsel %vm785, %v784, 0
        %v787 = vshrl.u32 %v786, 5
        %v788 = vand.u32 %v786, 31
        %v789 = vsub.s32 32, %v788
        %v790 = vshrl.u32 683565275, %v789
        %v791 = vshll.u32 683565275, %v788
        %v792 = vshrl.u32 2475754826, %v789
        %v793 = vor.u32 %v791, %v792
        %v794 = vshll.u32 2475754826, %v788
        %v795 = vshrl.u32 2131351028, %v789
        %v796 = vor.u32 %v794, %v795
        %v797 = vshll.u32 2131351028, %v788
        %v798 = vshrl.u32 2102212464, %v789
        %v799 = vor.u32 %v797, %v798
        %v800 = vshll.u32 2102212464, %v788
        %v801 = vshrl.u32 920167782, %v789
        %v802 = vor.u32 %v800, %v801
        %v803 = vshll.u32 920167782, %v788
        %v804 = vshrl.u32 1326507024, %v789
        %v805 = vor.u32 %v803, %v804
        %vm806 = vcmp.lt.s32.totalorder %v787, 1
        %vm807 = vcmp.lt.s32.totalorder %v787, 2
        %vm808 = vcmp.lt.s32.totalorder %v787, 3
        %vm809 = vcmp.lt.s32.totalorder %v787, 4
        %v810 = vsel %vm806, %v790, %v793
        %v811 = vsel %vm809, %v799, 2102212464
        %v812 = vsel %vm808, %v796, %v811
        %v813 = vsel %vm807, %v810, %v812
        %v814 = vsel %vm806, %v793, %v796
        %v815 = vsel %vm809, %v802, 920167782
        %v816 = vsel %vm808, %v799, %v815
        %v817 = vsel %vm807, %v814, %v816
        %v818 = vsel %vm806, %v796, %v799
        %v819 = vsel %vm809, %v805, 1326507024
        %v820 = vsel %vm808, %v802, %v819
        %v821 = vsel %vm807, %v818, %v820
        %v822 = vshll.u32 %v782, 8
        %v823 = vmul.u32.u64.compose %v822, %v821
        %v824 = vextract.low.u32 %v823
        %v825 = vextract.high.u32 %v823
        %v826 = vmul.u32.u64.compose %v822, %v817
        %v827 = vextract.low.u32 %v826
        %v828 = vextract.high.u32 %v826
        %v829 = vmul.u32 %v822, %v813
        %v830 = vadd.s32 %v825, %v827
        %vm831 = vc.u32 %v825, %v827
        %v832 = vadd.s32 %v828, 1
        %v833 = vsel %vm831, %v832, %v828
        %v834 = vadd.s32 %v829, %v833
        %v835 = vadd.s32 %v834, 536870912
        %v836 = vshrl.u32 %v835, 30
        %v837 = vshll.u32 %v836, 30
        %v838 = vsub.s32 %v834, %v837
        %vm839 = vcmp.lt.s32.totalorder %v838, 0
        %v840 = vsub.s32 0, %v838
        %v841 = vsel %vm839, %v840, %v838
        %v842 = vclz %v841
        %v843 = vsub.s32 %v842, 2
        %vm844 = vcmp.gt.s32.totalorder 0, %v843
        %v845 = vsel %vm844, 0, %v843
        %v846 = vsub.s32 32, %v845
        %v847 = vshll.u32 %v838, %v845
        %v848 = vshrl.u32 %v830, %v846
        %v849 = vor.u32 %v847, %v848
        %v850 = vsub.s32 4294967266, %v845
        %v851 = vadd.s32 %v850, 127
        %v852 = vshll.u32 %v851, 23
        %v853 = vor.u32 4788187, %v852
        %v854 = vand.u32 2147483647, %v853
        %v856 = vcvt.s32.f32 %v849
        %v857 = vmul.f32 %v856, %v854
        %v858 = vxor.u32 %v857, 2147483648
        %v859 = vsel %vm776, %v858, %v857
        %v860 = vsub.s32 4, %v836
        %v861 = vsel %vm776, %v860, %v836
        %v862 = vsel %vm775, %v460, %v859
        %v863 = vsel %vm775, 0, %v861
        %v864 = vcosq.f32.pop %v862
        %v865 = vsinq.f32.pop %v862
        %vm866 = vweird.f32 %v460
        %v867 = vand.u32 %v863, 3
        %vm868 = vcmp.lt.s32.totalorder %v867, 2
        %vm869 = vcmp.eq.s32.totalorder %v867, 0
        %v870 = vxor.u32 %v865, 2147483648
        %v871 = vsel %vm869, %v864, %v870
        %vm872 = vcmp.eq.s32.totalorder %v867, 2
        %v873 = vxor.u32 %v864, 2147483648
        %v874 = vsel %vm872, %v873, %v865
        %v875 = vsel %vm868, %v871, %v874
        %v876 = vsel %vm866, nan, %v875
        %v877 = vand.u32 2147483647, %v461
        %vm878 = vcmp.le.f32.partialorder %v877, 0.7853982
        %vm879 = vcmp.lt.s32.totalorder %v461, 0
        %v880 = vand.u32 %v461, 2139095040
        %v881 = vshrl.u32 %v880, 23
        %v882 = vsub.s32 %v881, 127
        %v883 = vand.u32 2147483647, %v461
        %v884 = vand.u32 %v883, 8388607
        %v885 = vor.u32 %v884, 8388608
        %v886 = vsub.s32 0, %v885
        %v887 = vadd.s32 %v882, 1
        %vm888 = vcmp.gt.s32.totalorder %v887, 0
        %v889 = vsel %vm888, %v887, 0
        %v890 = vshrl.u32 %v889, 5
        %v891 = vand.u32 %v889, 31
        %v892 = vsub.s32 32, %v891
        %v893 = vshrl.u32 683565275, %v892
        %v894 = vshll.u32 683565275, %v891
        %v895 = vshrl.u32 2475754826, %v892
        %v896 = vor.u32 %v894, %v895
        %v897 = vshll.u32 2475754826, %v891
        %v898 = vshrl.u32 2131351028, %v892
        %v899 = vor.u32 %v897, %v898
        %v900 = vshll.u32 2131351028, %v891
        %v901 = vshrl.u32 2102212464, %v892
        %v902 = vor.u32 %v900, %v901
        %v903 = vshll.u32 2102212464, %v891
        %v904 = vshrl.u32 920167782, %v892
        %v905 = vor.u32 %v903, %v904
        %v906 = vshll.u32 920167782, %v891
        %v907 = vshrl.u32 1326507024, %v892
        %v908 = vor.u32 %v906, %v907
        %vm909 = vcmp.lt.s32.totalorder %v890, 1
        %vm910 = vcmp.lt.s32.totalorder %v890, 2
        %vm911 = vcmp.lt.s32.totalorder %v890, 3
        %vm912 = vcmp.lt.s32.totalorder %v890, 4
        %v913 = vsel %vm909, %v893, %v896
        %v914 = vsel %vm912, %v902, 2102212464
        %v915 = vsel %vm911, %v899, %v914
        %v916 = vsel %vm910, %v913, %v915
        %v917 = vsel %vm909, %v896, %v899
        %v918 = vsel %vm912, %v905, 920167782
        %v919 = vsel %vm911, %v902, %v918
        %v920 = vsel %vm910, %v917, %v919
        %v921 = vsel %vm909, %v899, %v902
        %v922 = vsel %vm912, %v908, 1326507024
        %v923 = vsel %vm911, %v905, %v922
        %v924 = vsel %vm910, %v921, %v923
        %v925 = vshll.u32 %v885, 8
        %v926 = vmul.u32.u64.compose %v925, %v924
        %v927 = vextract.low.u32 %v926
        %v928 = vextract.high.u32 %v926
        %v929 = vmul.u32.u64.compose %v925, %v920
        %v930 = vextract.low.u32 %v929
        %v931 = vextract.high.u32 %v929
        %v932 = vmul.u32 %v925, %v916
        %v933 = vadd.s32 %v928, %v930
        %vm934 = vc.u32 %v928, %v930
        %v935 = vadd.s32 %v931, 1
        %v936 = vsel %vm934, %v935, %v931
        %v937 = vadd.s32 %v932, %v936
        %v938 = vadd.s32 %v937, 536870912
        %v939 = vshrl.u32 %v938, 30
        %v940 = vshll.u32 %v939, 30
        %v941 = vsub.s32 %v937, %v940
        %vm942 = vcmp.lt.s32.totalorder %v941, 0
        %v943 = vsub.s32 0, %v941
        %v944 = vsel %vm942, %v943, %v941
        %v945 = vclz %v944
        %v946 = vsub.s32 %v945, 2
        %vm947 = vcmp.gt.s32.totalorder 0, %v946
        %v948 = vsel %vm947, 0, %v946
        %v949 = vsub.s32 32, %v948
        %v950 = vshll.u32 %v941, %v948
        %v951 = vshrl.u32 %v933, %v949
        %v952 = vor.u32 %v950, %v951
        %v953 = vsub.s32 4294967266, %v948
        %v954 = vadd.s32 %v953, 127
        %v955 = vshll.u32 %v954, 23
        %v956 = vor.u32 4788187, %v955
        %v957 = vand.u32 2147483647, %v956
        %v959 = vcvt.s32.f32 %v952
        %v960 = vmul.f32 %v959, %v957
        %v961 = vxor.u32 %v960, 2147483648
        %v962 = vsel %vm879, %v961, %v960
        %v963 = vsub.s32 4, %v939
        %v964 = vsel %vm879, %v963, %v939
        %v965 = vsel %vm878, %v461, %v962
        %v966 = vsel %vm878, 0, %v964
        %v967 = vcosq.f32.pop %v965
        %v968 = vsinq.f32.pop %v965
        %vm969 = vweird.f32 %v461
        %v970 = vand.u32 %v966, 3
        %vm971 = vcmp.lt.s32.totalorder %v970, 2
        %vm972 = vcmp.eq.s32.totalorder %v970, 0
        %v973 = vxor.u32 %v968, 2147483648
        %v974 = vsel %vm972, %v967, %v973
        %vm975 = vcmp.eq.s32.totalorder %v970, 2
        %v976 = vxor.u32 %v967, 2147483648
        %v977 = vsel %vm975, %v976, %v968
        %v978 = vsel %vm971, %v974, %v977
        %v979 = vsel %vm969, nan, %v978
        %v980 = vand.u32 2147483647, %v462
        %vm981 = vcmp.le.f32.partialorder %v980, 0.7853982
        %vm982 = vcmp.lt.s32.totalorder %v462, 0
        %v983 = vand.u32 %v462, 2139095040
        %v984 = vshrl.u32 %v983, 23
        %v985 = vsub.s32 %v984, 127
        %v986 = vand.u32 2147483647, %v462
        %v987 = vand.u32 %v986, 8388607
        %v988 = vor.u32 %v987, 8388608
        %v989 = vsub.s32 0, %v988
        %v990 = vadd.s32 %v985, 1
        %vm991 = vcmp.gt.s32.totalorder %v990, 0
        %v992 = vsel %vm991, %v990, 0
        %v993 = vshrl.u32 %v992, 5
        %v994 = vand.u32 %v992, 31
        %v995 = vsub.s32 32, %v994
        %v996 = vshrl.u32 683565275, %v995
        %v997 = vshll.u32 683565275, %v994
        %v998 = vshrl.u32 2475754826, %v995
        %v999 = vor.u32 %v997, %v998
        %v1000 = vshll.u32 2475754826, %v994
        %v1001 = vshrl.u32 2131351028, %v995
        %v1002 = vor.u32 %v1000, %v1001
        %v1003 = vshll.u32 2131351028, %v994
        %v1004 = vshrl.u32 2102212464, %v995
        %v1005 = vor.u32 %v1003, %v1004
        %v1006 = vshll.u32 2102212464, %v994
        %v1007 = vshrl.u32 920167782, %v995
        %v1008 = vor.u32 %v1006, %v1007
        %v1009 = vshll.u32 920167782, %v994
        %v1010 = vshrl.u32 1326507024, %v995
        %v1011 = vor.u32 %v1009, %v1010
        %vm1012 = vcmp.lt.s32.totalorder %v993, 1
        %vm1013 = vcmp.lt.s32.totalorder %v993, 2
        %vm1014 = vcmp.lt.s32.totalorder %v993, 3
        %vm1015 = vcmp.lt.s32.totalorder %v993, 4
        %v1016 = vsel %vm1012, %v996, %v999
        %v1017 = vsel %vm1015, %v1005, 2102212464
        %v1018 = vsel %vm1014, %v1002, %v1017
        %v1019 = vsel %vm1013, %v1016, %v1018
        %v1020 = vsel %vm1012, %v999, %v1002
        %v1021 = vsel %vm1015, %v1008, 920167782
        %v1022 = vsel %vm1014, %v1005, %v1021
        %v1023 = vsel %vm1013, %v1020, %v1022
        %v1024 = vsel %vm1012, %v1002, %v1005
        %v1025 = vsel %vm1015, %v1011, 1326507024
        %v1026 = vsel %vm1014, %v1008, %v1025
        %v1027 = vsel %vm1013, %v1024, %v1026
        %v1028 = vshll.u32 %v988, 8
        %v1029 = vmul.u32.u64.compose %v1028, %v1027
        %v1030 = vextract.low.u32 %v1029
        %v1031 = vextract.high.u32 %v1029
        %v1032 = vmul.u32.u64.compose %v1028, %v1023
        %v1033 = vextract.low.u32 %v1032
        %v1034 = vextract.high.u32 %v1032
        %v1035 = vmul.u32 %v1028, %v1019
        %v1036 = vadd.s32 %v1031, %v1033
        %vm1037 = vc.u32 %v1031, %v1033
        %v1038 = vadd.s32 %v1034, 1
        %v1039 = vsel %vm1037, %v1038, %v1034
        %v1040 = vadd.s32 %v1035, %v1039
        %v1041 = vadd.s32 %v1040, 536870912
        %v1042 = vshrl.u32 %v1041, 30
        %v1043 = vshll.u32 %v1042, 30
        %v1044 = vsub.s32 %v1040, %v1043
        %vm1045 = vcmp.lt.s32.totalorder %v1044, 0
        %v1046 = vsub.s32 0, %v1044
        %v1047 = vsel %vm1045, %v1046, %v1044
        %v1048 = vclz %v1047
        %v1049 = vsub.s32 %v1048, 2
        %vm1050 = vcmp.gt.s32.totalorder 0, %v1049
        %v1051 = vsel %vm1050, 0, %v1049
        %v1052 = vsub.s32 32, %v1051
        %v1053 = vshll.u32 %v1044, %v1051
        %v1054 = vshrl.u32 %v1036, %v1052
        %v1055 = vor.u32 %v1053, %v1054
        %v1056 = vsub.s32 4294967266, %v1051
        %v1057 = vadd.s32 %v1056, 127
        %v1058 = vshll.u32 %v1057, 23
        %v1059 = vor.u32 4788187, %v1058
        %v1060 = vand.u32 2147483647, %v1059
        %v1062 = vcvt.s32.f32 %v1055
        %v1063 = vmul.f32 %v1062, %v1060
        %v1064 = vxor.u32 %v1063, 2147483648
        %v1065 = vsel %vm982, %v1064, %v1063
        %v1066 = vsub.s32 4, %v1042
        %v1067 = vsel %vm982, %v1066, %v1042
        %v1068 = vsel %vm981, %v462, %v1065
        %v1069 = vsel %vm981, 0, %v1067
        %v1070 = vcosq.f32.pop %v1068
        %v1071 = vsinq.f32.pop %v1068
        %vm1072 = vweird.f32 %v462
        %v1073 = vand.u32 %v1069, 3
        %vm1074 = vcmp.lt.s32.totalorder %v1073, 2
        %vm1075 = vcmp.eq.s32.totalorder %v1073, 0
        %v1076 = vxor.u32 %v1071, 2147483648
        %v1077 = vsel %vm1075, %v1070, %v1076
        %vm1078 = vcmp.eq.s32.totalorder %v1073, 2
        %v1079 = vxor.u32 %v1070, 2147483648
        %v1080 = vsel %vm1078, %v1079, %v1071
        %v1081 = vsel %vm1074, %v1077, %v1080
        %v1082 = vsel %vm1072, nan, %v1081
        %v1083 = vand.u32 2147483647, %v463
        %vm1084 = vcmp.le.f32.partialorder %v1083, 0.7853982
        %vm1085 = vcmp.lt.s32.totalorder %v463, 0
        %v1086 = vand.u32 %v463, 2139095040
        %v1087 = vshrl.u32 %v1086, 23
        %v1088 = vsub.s32 %v1087, 127
        %v1089 = vand.u32 2147483647, %v463
        %v1090 = vand.u32 %v1089, 8388607
        %v1091 = vor.u32 %v1090, 8388608
        %v1092 = vsub.s32 0, %v1091
        %v1093 = vadd.s32 %v1088, 1
        %vm1094 = vcmp.gt.s32.totalorder %v1093, 0
        %v1095 = vsel %vm1094, %v1093, 0
        %v1096 = vshrl.u32 %v1095, 5
        %v1097 = vand.u32 %v1095, 31
        %v1098 = vsub.s32 32, %v1097
        %v1099 = vshrl.u32 683565275, %v1098
        %v1100 = vshll.u32 683565275, %v1097
        %v1101 = vshrl.u32 2475754826, %v1098
        %v1102 = vor.u32 %v1100, %v1101
        %v1103 = vshll.u32 2475754826, %v1097
        %v1104 = vshrl.u32 2131351028, %v1098
        %v1105 = vor.u32 %v1103, %v1104
        %v1106 = vshll.u32 2131351028, %v1097
        %v1107 = vshrl.u32 2102212464, %v1098
        %v1108 = vor.u32 %v1106, %v1107
        %v1109 = vshll.u32 2102212464, %v1097
        %v1110 = vshrl.u32 920167782, %v1098
        %v1111 = vor.u32 %v1109, %v1110
        %v1112 = vshll.u32 920167782, %v1097
        %v1113 = vshrl.u32 1326507024, %v1098
        %v1114 = vor.u32 %v1112, %v1113
        %vm1115 = vcmp.lt.s32.totalorder %v1096, 1
        %vm1116 = vcmp.lt.s32.totalorder %v1096, 2
        %vm1117 = vcmp.lt.s32.totalorder %v1096, 3
        %vm1118 = vcmp.lt.s32.totalorder %v1096, 4
        %v1119 = vsel %vm1115, %v1099, %v1102
        %v1120 = vsel %vm1118, %v1108, 2102212464
        %v1121 = vsel %vm1117, %v1105, %v1120
        %v1122 = vsel %vm1116, %v1119, %v1121
        %v1123 = vsel %vm1115, %v1102, %v1105
        %v1124 = vsel %vm1118, %v1111, 920167782
        %v1125 = vsel %vm1117, %v1108, %v1124
        %v1126 = vsel %vm1116, %v1123, %v1125
        %v1127 = vsel %vm1115, %v1105, %v1108
        %v1128 = vsel %vm1118, %v1114, 1326507024
        %v1129 = vsel %vm1117, %v1111, %v1128
        %v1130 = vsel %vm1116, %v1127, %v1129
        %v1131 = vshll.u32 %v1091, 8
        %v1132 = vmul.u32.u64.compose %v1131, %v1130
        %v1133 = vextract.low.u32 %v1132
        %v1134 = vextract.high.u32 %v1132
        %v1135 = vmul.u32.u64.compose %v1131, %v1126
        %v1136 = vextract.low.u32 %v1135
        %v1137 = vextract.high.u32 %v1135
        %v1138 = vmul.u32 %v1131, %v1122
        %v1139 = vadd.s32 %v1134, %v1136
        %vm1140 = vc.u32 %v1134, %v1136
        %v1141 = vadd.s32 %v1137, 1
        %v1142 = vsel %vm1140, %v1141, %v1137
        %v1143 = vadd.s32 %v1138, %v1142
        %v1144 = vadd.s32 %v1143, 536870912
        %v1145 = vshrl.u32 %v1144, 30
        %v1146 = vshll.u32 %v1145, 30
        %v1147 = vsub.s32 %v1143, %v1146
        %vm1148 = vcmp.lt.s32.totalorder %v1147, 0
        %v1149 = vsub.s32 0, %v1147
        %v1150 = vsel %vm1148, %v1149, %v1147
        %v1151 = vclz %v1150
        %v1152 = vsub.s32 %v1151, 2
        %vm1153 = vcmp.gt.s32.totalorder 0, %v1152
        %v1154 = vsel %vm1153, 0, %v1152
        %v1155 = vsub.s32 32, %v1154
        %v1156 = vshll.u32 %v1147, %v1154
        %v1157 = vshrl.u32 %v1139, %v1155
        %v1158 = vor.u32 %v1156, %v1157
        %v1159 = vsub.s32 4294967266, %v1154
        %v1160 = vadd.s32 %v1159, 127
        %v1161 = vshll.u32 %v1160, 23
        %v1162 = vor.u32 4788187, %v1161
        %v1163 = vand.u32 2147483647, %v1162
        %v1165 = vcvt.s32.f32 %v1158
        %v1166 = vmul.f32 %v1165, %v1163
        %v1167 = vxor.u32 %v1166, 2147483648
        %v1168 = vsel %vm1085, %v1167, %v1166
        %v1169 = vsub.s32 4, %v1145
        %v1170 = vsel %vm1085, %v1169, %v1145
        %v1171 = vsel %vm1084, %v463, %v1168
        %v1172 = vsel %vm1084, 0, %v1170
        %v1173 = vcosq.f32.pop %v1171
        %v1174 = vsinq.f32.pop %v1171
        %vm1175 = vweird.f32 %v463
        %v1176 = vand.u32 %v1172, 3
        %vm1177 = vcmp.lt.s32.totalorder %v1176, 2
        %vm1178 = vcmp.eq.s32.totalorder %v1176, 0
        %v1179 = vxor.u32 %v1174, 2147483648
        %v1180 = vsel %vm1178, %v1173, %v1179
        %vm1181 = vcmp.eq.s32.totalorder %v1176, 2
        %v1182 = vxor.u32 %v1173, 2147483648
        %v1183 = vsel %vm1181, %v1182, %v1174
        %v1184 = vsel %vm1177, %v1180, %v1183
        %v1185 = vsel %vm1175, nan, %v1184
        %v1186 = vand.u32 2147483647, %v464
        %vm1187 = vcmp.le.f32.partialorder %v1186, 0.7853982
        %vm1188 = vcmp.lt.s32.totalorder %v464, 0
        %v1189 = vand.u32 %v464, 2139095040
        %v1190 = vshrl.u32 %v1189, 23
        %v1191 = vsub.s32 %v1190, 127
        %v1192 = vand.u32 2147483647, %v464
        %v1193 = vand.u32 %v1192, 8388607
        %v1194 = vor.u32 %v1193, 8388608
        %v1195 = vsub.s32 0, %v1194
        %v1196 = vadd.s32 %v1191, 1
        %vm1197 = vcmp.gt.s32.totalorder %v1196, 0
        %v1198 = vsel %vm1197, %v1196, 0
        %v1199 = vshrl.u32 %v1198, 5
        %v1200 = vand.u32 %v1198, 31
        %v1201 = vsub.s32 32, %v1200
        %v1202 = vshrl.u32 683565275, %v1201
        %v1203 = vshll.u32 683565275, %v1200
        %v1204 = vshrl.u32 2475754826, %v1201
        %v1205 = vor.u32 %v1203, %v1204
        %v1206 = vshll.u32 2475754826, %v1200
        %v1207 = vshrl.u32 2131351028, %v1201
        %v1208 = vor.u32 %v1206, %v1207
        %v1209 = vshll.u32 2131351028, %v1200
        %v1210 = vshrl.u32 2102212464, %v1201
        %v1211 = vor.u32 %v1209, %v1210
        %v1212 = vshll.u32 2102212464, %v1200
        %v1213 = vshrl.u32 920167782, %v1201
        %v1214 = vor.u32 %v1212, %v1213
        %v1215 = vshll.u32 920167782, %v1200
        %v1216 = vshrl.u32 1326507024, %v1201
        %v1217 = vor.u32 %v1215, %v1216
        %vm1218 = vcmp.lt.s32.totalorder %v1199, 1
        %vm1219 = vcmp.lt.s32.totalorder %v1199, 2
        %vm1220 = vcmp.lt.s32.totalorder %v1199, 3
        %vm1221 = vcmp.lt.s32.totalorder %v1199, 4
        %v1222 = vsel %vm1218, %v1202, %v1205
        %v1223 = vsel %vm1221, %v1211, 2102212464
        %v1224 = vsel %vm1220, %v1208, %v1223
        %v1225 = vsel %vm1219, %v1222, %v1224
        %v1226 = vsel %vm1218, %v1205, %v1208
        %v1227 = vsel %vm1221, %v1214, 920167782
        %v1228 = vsel %vm1220, %v1211, %v1227
        %v1229 = vsel %vm1219, %v1226, %v1228
        %v1230 = vsel %vm1218, %v1208, %v1211
        %v1231 = vsel %vm1221, %v1217, 1326507024
        %v1232 = vsel %vm1220, %v1214, %v1231
        %v1233 = vsel %vm1219, %v1230, %v1232
        %v1234 = vshll.u32 %v1194, 8
        %v1235 = vmul.u32.u64.compose %v1234, %v1233
        %v1236 = vextract.low.u32 %v1235
        %v1237 = vextract.high.u32 %v1235
        %v1238 = vmul.u32.u64.compose %v1234, %v1229
        %v1239 = vextract.low.u32 %v1238
        %v1240 = vextract.high.u32 %v1238
        %v1241 = vmul.u32 %v1234, %v1225
        %v1242 = vadd.s32 %v1237, %v1239
        %vm1243 = vc.u32 %v1237, %v1239
        %v1244 = vadd.s32 %v1240, 1
        %v1245 = vsel %vm1243, %v1244, %v1240
        %v1246 = vadd.s32 %v1241, %v1245
        %v1247 = vadd.s32 %v1246, 536870912
        %v1248 = vshrl.u32 %v1247, 30
        %v1249 = vshll.u32 %v1248, 30
        %v1250 = vsub.s32 %v1246, %v1249
        %vm1251 = vcmp.lt.s32.totalorder %v1250, 0
        %v1252 = vsub.s32 0, %v1250
        %v1253 = vsel %vm1251, %v1252, %v1250
        %v1254 = vclz %v1253
        %v1255 = vsub.s32 %v1254, 2
        %vm1256 = vcmp.gt.s32.totalorder 0, %v1255
        %v1257 = vsel %vm1256, 0, %v1255
        %v1258 = vsub.s32 32, %v1257
        %v1259 = vshll.u32 %v1250, %v1257
        %v1260 = vshrl.u32 %v1242, %v1258
        %v1261 = vor.u32 %v1259, %v1260
        %v1262 = vsub.s32 4294967266, %v1257
        %v1263 = vadd.s32 %v1262, 127
        %v1264 = vshll.u32 %v1263, 23
        %v1265 = vor.u32 4788187, %v1264
        %v1266 = vand.u32 2147483647, %v1265
        %v1268 = vcvt.s32.f32 %v1261
        %v1269 = vmul.f32 %v1268, %v1266
        %v1270 = vxor.u32 %v1269, 2147483648
        %v1271 = vsel %vm1188, %v1270, %v1269
        %v1272 = vsub.s32 4, %v1248
        %v1273 = vsel %vm1188, %v1272, %v1248
        %v1274 = vsel %vm1187, %v464, %v1271
        %v1275 = vsel %vm1187, 0, %v1273
        %v1276 = vcosq.f32.pop %v1274
        %v1277 = vsinq.f32.pop %v1274
        %vm1278 = vweird.f32 %v464
        %v1279 = vand.u32 %v1275, 3
        %vm1280 = vcmp.lt.s32.totalorder %v1279, 2
        %vm1281 = vcmp.eq.s32.totalorder %v1279, 0
        %v1282 = vxor.u32 %v1277, 2147483648
        %v1283 = vsel %vm1281, %v1276, %v1282
        %vm1284 = vcmp.eq.s32.totalorder %v1279, 2
        %v1285 = vxor.u32 %v1276, 2147483648
        %v1286 = vsel %vm1284, %v1285, %v1277
        %v1287 = vsel %vm1280, %v1283, %v1286
        %v1288 = vsel %vm1278, nan, %v1287
        %v1289 = vpack.c.bf16 %v670, %v567
        %v1290 = vpack.c.bf16 %v876, %v773
        %v1291 = vpack.c.bf16 %v1082, %v979
        %v1292 = vpack.c.bf16 %v1288, %v1185
        %v1293 = vld [vmem:[%s2] sm:$0xf]
        %v1294 = vld [vmem:[%s2 + $0x4] sm:$0xf]
        %v1295 = vld [vmem:[%s2 + $0x8] sm:$0xf]
        %v1296 = vld [vmem:[%s2 + $0xc] sm:$0xf]
        %v1297 = vld [vmem:[%s2 + $0x10] sm:$0xf]
        %v1298 = vld [vmem:[%s2 + $0x14] sm:$0xf]
        %v1299 = vld [vmem:[%s2 + $0x18] sm:$0xf]
        %v1300 = vld [vmem:[%s2 + $0x1c] sm:$0xf]
        %v1301 = vld [vmem:[%s2 + $0x20] sm:$0xf]
        %v1302 = vld [vmem:[%s2 + $0x24] sm:$0xf]
        %v1303 = vld [vmem:[%s2 + $0x28] sm:$0xf]
        %v1304 = vld [vmem:[%s2 + $0x2c] sm:$0xf]
        %v1305 = vld [vmem:[%s2 + $0x30] sm:$0xf]
        %v1306 = vld [vmem:[%s2 + $0x34] sm:$0xf]
        %v1307 = vld [vmem:[%s2 + $0x38] sm:$0xf]
        %v1308 = vld [vmem:[%s2 + $0x3c] sm:$0xf]
        %v1309 = vld [vmem:[%s3] sm:$0x1]
        %v1311 = vlaneseq
        %v1312 = vshrl.u32 %v1311, 7
        %v1313 = vsub.s32 0, %v1312
        %v1314 = vrot.slane %v1309, %v1313
        %v1332 = vunpack.c.l.b16 %v1293
        %v1333 = vunpack.c.l.b16 %v1294
        %v1334 = vunpack.c.l.b16 %v1295
        %v1335 = vunpack.c.l.b16 %v1296
        %v1336 = vunpack.c.l.b16 %v1297
        %v1337 = vunpack.c.l.b16 %v1298
        %v1338 = vunpack.c.l.b16 %v1299
        %v1339 = vunpack.c.l.b16 %v1300
        %v1340 = vunpack.c.l.b16 %v1301
        %v1341 = vunpack.c.l.b16 %v1302
        %v1342 = vunpack.c.l.b16 %v1303
        %v1343 = vunpack.c.l.b16 %v1304
        %v1344 = vunpack.c.l.b16 %v1305
        %v1345 = vunpack.c.l.b16 %v1306
        %v1346 = vunpack.c.l.b16 %v1307
        %v1347 = vunpack.c.l.b16 %v1308
        %v1348 = vpack.c.b16 %v1333, %v1332
        %v1349 = vpack.c.b16 %v1335, %v1334
        %v1350 = vpack.c.b16 %v1337, %v1336
        %v1351 = vpack.c.b16 %v1339, %v1338
        %v1352 = vpack.c.b16 %v1341, %v1340
        %v1353 = vpack.c.b16 %v1343, %v1342
        %v1354 = vpack.c.b16 %v1345, %v1344
        %v1355 = vpack.c.b16 %v1347, %v1346
        %1364 = vmatprep.subr.bf16.mxu0 0
        %1365 = vmatpush1.bf16.msra.mxu0 %v1348
        %1366 = vmatprep.subr.bf16.mxu0 0
        %1367 = vmatpush1.bf16.msra.mxu0 %v1349
        %1368 = vmatprep.subr.bf16.mxu0 0
        %1369 = vmatpush1.bf16.msra.mxu0 %v1350
        %1370 = vmatprep.subr.bf16.mxu0 0
        %1371 = vmatpush1.bf16.msra.mxu0 %v1351
        %1372 = vmatprep.subr.bf16.mxu0 0
        %1373 = vmatpush1.bf16.msra.mxu0 %v1352
        %1374 = vmatprep.subr.bf16.mxu0 0
        %1375 = vmatpush1.bf16.msra.mxu0 %v1353
        %1376 = vmatprep.subr.bf16.mxu0 0
        %1377 = vmatpush1.bf16.msra.mxu0 %v1354
        %1378 = vmatprep.subr.bf16.mxu0 0
        %1379 = vmatpush1.bf16.msra.mxu0 %v1355
        %1380 = vmatprep.subr.bf16.mxu0 0
        %1381 = vmatpush1.bf16.msra.mxu0 0
        %1382 = vmatprep.subr.bf16.mxu0 0
        %1383 = vmatpush1.bf16.msra.mxu0 0
        %1384 = vmatprep.subr.bf16.mxu0 0
        %1385 = vmatpush1.bf16.msra.mxu0 0
        %1386 = vmatprep.subr.bf16.mxu0 0
        %1387 = vmatpush1.bf16.msra.mxu0 0
        %1388 = vmatprep.subr.bf16.mxu0 0
        %1389 = vmatpush1.bf16.msra.mxu0 0
        %1390 = vmatprep.subr.bf16.mxu0 0
        %1391 = vmatpush1.bf16.msra.mxu0 0
        %1392 = vmatprep.subr.bf16.mxu0 0
        %1393 = vmatpush1.bf16.msra.mxu0 0
        %1394 = vmatprep.subr.bf16.mxu0 0
        %1395 = vmatpush1.bf16.msra.mxu0 0
        %1396 = vmatprep.mubr.bf16.mxu0 0
        %1397 = vmatmul.mubr.bf16.gmra.mrb[0].mxu0 %v1289
        %v1398 = vpop.f32.mrb[0].mxu0
        %v1399 = vadd.f32 %v1314, %v1398
        %v1400 = vpop.f32.mrb[0].mxu0
        %v1401 = vpop.f32.mrb[0].mxu0
        %v1402 = vadd.f32 %v1314, %v1401
        %v1403 = vpop.f32.mrb[0].mxu0
        %1404 = vmatprep.mubr.bf16.mxu0 0
        %1405 = vmatmul.mubr.bf16.gmra.mrb[0].mxu0 %v1290
        %v1406 = vpop.f32.mrb[0].mxu0
        %v1407 = vadd.f32 %v1314, %v1406
        %v1408 = vpop.f32.mrb[0].mxu0
        %v1409 = vpop.f32.mrb[0].mxu0
        %v1410 = vadd.f32 %v1314, %v1409
        %v1411 = vpop.f32.mrb[0].mxu0
        %1412 = vmatprep.mubr.bf16.mxu0 0
        %1413 = vmatmul.mubr.bf16.gmra.mrb[0].mxu0 %v1291
        %v1414 = vpop.f32.mrb[0].mxu0
        %v1415 = vadd.f32 %v1314, %v1414
        %v1416 = vpop.f32.mrb[0].mxu0
        %v1417 = vpop.f32.mrb[0].mxu0
        %v1418 = vadd.f32 %v1314, %v1417
        %v1419 = vpop.f32.mrb[0].mxu0
        %1420 = vmatprep.mubr.bf16.mxu0 0
        %1421 = vmatmul.mubr.bf16.gmra.mrb[0].mxu0 %v1292
        %v1422 = vpop.f32.mrb[0].mxu0
        %v1423 = vadd.f32 %v1314, %v1422
        %v1424 = vpop.f32.mrb[0].mxu0
        %v1425 = vpop.f32.mrb[0].mxu0
        %v1426 = vadd.f32 %v1314, %v1425
        %v1427 = vpop.f32.mrb[0].mxu0
        %1428 = vdwg.mxu0
        %v1429 = vmax.f32 %v1399, 0.0
        %v1430 = vmax.f32 %v1402, 0.0
        %v1431 = vmax.f32 %v1407, 0.0
        %v1432 = vmax.f32 %v1410, 0.0
        %v1433 = vmax.f32 %v1415, 0.0
        %v1434 = vmax.f32 %v1418, 0.0
        %v1435 = vmax.f32 %v1423, 0.0
        %v1436 = vmax.f32 %v1426, 0.0
        %v1437 = vld [vmem:[#allocation2] sm:$0xff]
        %v1438 = vmul.f32 %v1429, %v1437
        %v1439 = vmul.f32 %v1430, %v1437
        %v1440 = vmul.f32 %v1431, %v1437
        %v1441 = vmul.f32 %v1432, %v1437
        %v1442 = vmul.f32 %v1433, %v1437
        %v1443 = vmul.f32 %v1434, %v1437
        %v1444 = vmul.f32 %v1435, %v1437
        %v1445 = vmul.f32 %v1436, %v1437
        %v1446 = vpack.c.bf16 %v1439, %v1438
        %v1447 = vpack.c.bf16 %v1441, %v1440
        %v1448 = vpack.c.bf16 %v1443, %v1442
        %v1449 = vpack.c.bf16 %v1445, %v1444
        %v1450 = vld [vmem:[%s4] sm:$0xf]
        %v1451 = vld [vmem:[%s4 + $0x4] sm:$0xf]
        %v1452 = vld [vmem:[%s4 + $0x8] sm:$0xf]
        %v1453 = vld [vmem:[%s4 + $0xc] sm:$0xf]
        %v1454 = vld [vmem:[%s4 + $0x10] sm:$0xf]
        %v1455 = vld [vmem:[%s4 + $0x14] sm:$0xf]
        %v1456 = vld [vmem:[%s4 + $0x18] sm:$0xf]
        %v1457 = vld [vmem:[%s4 + $0x1c] sm:$0xf]
        %v1458 = vld [vmem:[%s4 + $0x20] sm:$0xf]
        %v1459 = vld [vmem:[%s4 + $0x24] sm:$0xf]
        %v1460 = vld [vmem:[%s4 + $0x28] sm:$0xf]
        %v1461 = vld [vmem:[%s4 + $0x2c] sm:$0xf]
        %v1462 = vld [vmem:[%s4 + $0x30] sm:$0xf]
        %v1463 = vld [vmem:[%s4 + $0x34] sm:$0xf]
        %v1464 = vld [vmem:[%s4 + $0x38] sm:$0xf]
        %v1465 = vld [vmem:[%s4 + $0x3c] sm:$0xf]
        %v1466 = vld [vmem:[%s5] sm:$0x1]
        %v1468 = vlaneseq
        %v1469 = vshrl.u32 %v1468, 7
        %v1470 = vsub.s32 0, %v1469
        %v1471 = vrot.slane %v1466, %v1470
        %v1489 = vunpack.c.l.b16 %v1450
        %v1490 = vunpack.c.l.b16 %v1451
        %v1491 = vunpack.c.l.b16 %v1452
        %v1492 = vunpack.c.l.b16 %v1453
        %v1493 = vunpack.c.l.b16 %v1454
        %v1494 = vunpack.c.l.b16 %v1455
        %v1495 = vunpack.c.l.b16 %v1456
        %v1496 = vunpack.c.l.b16 %v1457
        %v1497 = vunpack.c.l.b16 %v1458
        %v1498 = vunpack.c.l.b16 %v1459
        %v1499 = vunpack.c.l.b16 %v1460
        %v1500 = vunpack.c.l.b16 %v1461
        %v1501 = vunpack.c.l.b16 %v1462
        %v1502 = vunpack.c.l.b16 %v1463
        %v1503 = vunpack.c.l.b16 %v1464
        %v1504 = vunpack.c.l.b16 %v1465
        %v1505 = vpack.c.b16 %v1490, %v1489
        %v1506 = vpack.c.b16 %v1492, %v1491
        %v1507 = vpack.c.b16 %v1494, %v1493
        %v1508 = vpack.c.b16 %v1496, %v1495
        %v1509 = vpack.c.b16 %v1498, %v1497
        %v1510 = vpack.c.b16 %v1500, %v1499
        %v1511 = vpack.c.b16 %v1502, %v1501
        %v1512 = vpack.c.b16 %v1504, %v1503
        %1521 = vmatprep.subr.bf16.mxu0 0
        %1522 = vmatpush1.bf16.msra.mxu0 %v1505
        %1523 = vmatprep.subr.bf16.mxu0 0
        %1524 = vmatpush1.bf16.msra.mxu0 %v1506
        %1525 = vmatprep.subr.bf16.mxu0 0
        %1526 = vmatpush1.bf16.msra.mxu0 %v1507
        %1527 = vmatprep.subr.bf16.mxu0 0
        %1528 = vmatpush1.bf16.msra.mxu0 %v1508
        %1529 = vmatprep.subr.bf16.mxu0 0
        %1530 = vmatpush1.bf16.msra.mxu0 %v1509
        %1531 = vmatprep.subr.bf16.mxu0 0
        %1532 = vmatpush1.bf16.msra.mxu0 %v1510
        %1533 = vmatprep.subr.bf16.mxu0 0
        %1534 = vmatpush1.bf16.msra.mxu0 %v1511
        %1535 = vmatprep.subr.bf16.mxu0 0
        %1536 = vmatpush1.bf16.msra.mxu0 %v1512
        %1537 = vmatprep.subr.bf16.mxu0 0
        %1538 = vmatpush1.bf16.msra.mxu0 0
        %1539 = vmatprep.subr.bf16.mxu0 0
        %1540 = vmatpush1.bf16.msra.mxu0 0
        %1541 = vmatprep.subr.bf16.mxu0 0
        %1542 = vmatpush1.bf16.msra.mxu0 0
        %1543 = vmatprep.subr.bf16.mxu0 0
        %1544 = vmatpush1.bf16.msra.mxu0 0
        %1545 = vmatprep.subr.bf16.mxu0 0
        %1546 = vmatpush1.bf16.msra.mxu0 0
        %1547 = vmatprep.subr.bf16.mxu0 0
        %1548 = vmatpush1.bf16.msra.mxu0 0
        %1549 = vmatprep.subr.bf16.mxu0 0
        %1550 = vmatpush1.bf16.msra.mxu0 0
        %1551 = vmatprep.subr.bf16.mxu0 0
        %1552 = vmatpush1.bf16.msra.mxu0 0
        %1553 = vmatprep.mubr.bf16.mxu0 0
        %1554 = vmatmul.mubr.bf16.gmra.mrb[0].mxu0 %v1446
        %v1555 = vpop.f32.mrb[0].mxu0
        %v1556 = vadd.f32 %v1471, %v1555
        %v1557 = vpop.f32.mrb[0].mxu0
        %v1558 = vpop.f32.mrb[0].mxu0
        %v1559 = vadd.f32 %v1471, %v1558
        %v1560 = vpop.f32.mrb[0].mxu0
        %1561 = vmatprep.mubr.bf16.mxu0 0
        %1562 = vmatmul.mubr.bf16.gmra.mrb[0].mxu0 %v1447
        %v1563 = vpop.f32.mrb[0].mxu0
        %v1564 = vadd.f32 %v1471, %v1563
        %v1565 = vpop.f32.mrb[0].mxu0
        %v1566 = vpop.f32.mrb[0].mxu0
        %v1567 = vadd.f32 %v1471, %v1566
        %v1568 = vpop.f32.mrb[0].mxu0
        %1569 = vmatprep.mubr.bf16.mxu0 0
        %1570 = vmatmul.mubr.bf16.gmra.mrb[0].mxu0 %v1448
        %v1571 = vpop.f32.mrb[0].mxu0
        %v1572 = vadd.f32 %v1471, %v1571
        %v1573 = vpop.f32.mrb[0].mxu0
        %v1574 = vpop.f32.mrb[0].mxu0
        %v1575 = vadd.f32 %v1471, %v1574
        %v1576 = vpop.f32.mrb[0].mxu0
        %1577 = vmatprep.mubr.bf16.mxu0 0
        %1578 = vmatmul.mubr.bf16.gmra.mrb[0].mxu0 %v1449
        %v1579 = vpop.f32.mrb[0].mxu0
        %v1580 = vadd.f32 %v1471, %v1579
        %v1581 = vpop.f32.mrb[0].mxu0
        %v1582 = vpop.f32.mrb[0].mxu0
        %v1583 = vadd.f32 %v1471, %v1582
        %v1584 = vpop.f32.mrb[0].mxu0
        %1585 = vdwg.mxu0
        %v1586 = vmax.f32 %v1556, 0.0
        %v1587 = vmax.f32 %v1559, 0.0
        %v1588 = vmax.f32 %v1564, 0.0
        %v1589 = vmax.f32 %v1567, 0.0
        %v1590 = vmax.f32 %v1572, 0.0
        %v1591 = vmax.f32 %v1575, 0.0
        %v1592 = vmax.f32 %v1580, 0.0
        %v1593 = vmax.f32 %v1583, 0.0
        %v1594 = vpack.c.bf16 %v1587, %v1586
        %v1595 = vpack.c.bf16 %v1589, %v1588
        %v1596 = vpack.c.bf16 %v1591, %v1590
        %v1597 = vpack.c.bf16 %v1593, %v1592
        %v1598 = vld [vmem:[#allocation5] sm:$0xf]
        %v1599 = vld [vmem:[#allocation5 + $0x4] sm:$0xf]
        %v1600 = vld [vmem:[#allocation5 + $0x8] sm:$0xf]
        %v1601 = vld [vmem:[#allocation5 + $0xc] sm:$0xf]
        %v1602 = vld [vmem:[#allocation5 + $0x10] sm:$0xf]
        %v1603 = vld [vmem:[#allocation5 + $0x14] sm:$0xf]
        %v1604 = vld [vmem:[#allocation5 + $0x18] sm:$0xf]
        %v1605 = vld [vmem:[#allocation5 + $0x1c] sm:$0xf]
        %v1606 = vld [vmem:[#allocation5 + $0x20] sm:$0xf]
        %v1607 = vld [vmem:[#allocation5 + $0x24] sm:$0xf]
        %v1608 = vld [vmem:[#allocation5 + $0x28] sm:$0xf]
        %v1609 = vld [vmem:[#allocation5 + $0x2c] sm:$0xf]
        %v1610 = vld [vmem:[#allocation5 + $0x30] sm:$0xf]
        %v1611 = vld [vmem:[#allocation5 + $0x34] sm:$0xf]
        %v1612 = vld [vmem:[#allocation5 + $0x38] sm:$0xf]
        %v1613 = vld [vmem:[#allocation5 + $0x3c] sm:$0xf]
        %v1614 = vld [vmem:[%s7] sm:$0x1]
        %v1616 = vlaneseq
        %v1617 = vshrl.u32 %v1616, 7
        %v1618 = vsub.s32 0, %v1617
        %v1619 = vrot.slane %v1614, %v1618
        %v1637 = vunpack.c.l.b16 %v1598
        %v1638 = vunpack.c.l.b16 %v1599
        %v1639 = vunpack.c.l.b16 %v1600
        %v1640 = vunpack.c.l.b16 %v1601
        %v1641 = vunpack.c.l.b16 %v1602
        %v1642 = vunpack.c.l.b16 %v1603
        %v1643 = vunpack.c.l.b16 %v1604
        %v1644 = vunpack.c.l.b16 %v1605
        %v1645 = vunpack.c.l.b16 %v1606
        %v1646 = vunpack.c.l.b16 %v1607
        %v1647 = vunpack.c.l.b16 %v1608
        %v1648 = vunpack.c.l.b16 %v1609
        %v1649 = vunpack.c.l.b16 %v1610
        %v1650 = vunpack.c.l.b16 %v1611
        %v1651 = vunpack.c.l.b16 %v1612
        %v1652 = vunpack.c.l.b16 %v1613
        %v1653 = vpack.c.b16 %v1638, %v1637
        %v1654 = vpack.c.b16 %v1640, %v1639
        %v1655 = vpack.c.b16 %v1642, %v1641
        %v1656 = vpack.c.b16 %v1644, %v1643
        %v1657 = vpack.c.b16 %v1646, %v1645
        %v1658 = vpack.c.b16 %v1648, %v1647
        %v1659 = vpack.c.b16 %v1650, %v1649
        %v1660 = vpack.c.b16 %v1652, %v1651
        %1669 = vmatprep.subr.bf16.mxu0 0
        %1670 = vmatpush1.bf16.msra.mxu0 %v1653
        %1671 = vmatprep.subr.bf16.mxu0 0
        %1672 = vmatpush1.bf16.msra.mxu0 %v1654
        %1673 = vmatprep.subr.bf16.mxu0 0
        %1674 = vmatpush1.bf16.msra.mxu0 %v1655
        %1675 = vmatprep.subr.bf16.mxu0 0
        %1676 = vmatpush1.bf16.msra.mxu0 %v1656
        %1677 = vmatprep.subr.bf16.mxu0 0
        %1678 = vmatpush1.bf16.msra.mxu0 %v1657
        %1679 = vmatprep.subr.bf16.mxu0 0
        %1680 = vmatpush1.bf16.msra.mxu0 %v1658
        %1681 = vmatprep.subr.bf16.mxu0 0
        %1682 = vmatpush1.bf16.msra.mxu0 %v1659
        %1683 = vmatprep.subr.bf16.mxu0 0
        %1684 = vmatpush1.bf16.msra.mxu0 %v1660
        %1685 = vmatprep.subr.bf16.mxu0 0
        %1686 = vmatpush1.bf16.msra.mxu0 0
        %1687 = vmatprep.subr.bf16.mxu0 0
        %1688 = vmatpush1.bf16.msra.mxu0 0
        %1689 = vmatprep.subr.bf16.mxu0 0
        %1690 = vmatpush1.bf16.msra.mxu0 0
        %1691 = vmatprep.subr.bf16.mxu0 0
        %1692 = vmatpush1.bf16.msra.mxu0 0
        %1693 = vmatprep.subr.bf16.mxu0 0
        %1694 = vmatpush1.bf16.msra.mxu0 0
        %1695 = vmatprep.subr.bf16.mxu0 0
        %1696 = vmatpush1.bf16.msra.mxu0 0
        %1697 = vmatprep.subr.bf16.mxu0 0
        %1698 = vmatpush1.bf16.msra.mxu0 0
        %1699 = vmatprep.subr.bf16.mxu0 0
        %1700 = vmatpush1.bf16.msra.mxu0 0
        %1701 = vmatprep.mubr.bf16.mxu0 0
        %1702 = vmatmul.mubr.bf16.gmra.mrb[0].mxu0 %v1594
        %v1703 = vpop.f32.mrb[0].mxu0
        %v1704 = vadd.f32 %v1619, %v1703
        %v1705 = vpop.f32.mrb[0].mxu0
        %v1706 = vpop.f32.mrb[0].mxu0
        %v1707 = vadd.f32 %v1619, %v1706
        %v1708 = vpop.f32.mrb[0].mxu0
        %1709 = vmatprep.mubr.bf16.mxu0 0
        %1710 = vmatmul.mubr.bf16.gmra.mrb[0].mxu0 %v1595
        %v1711 = vpop.f32.mrb[0].mxu0
        %v1712 = vadd.f32 %v1619, %v1711
        %v1713 = vpop.f32.mrb[0].mxu0
        %v1714 = vpop.f32.mrb[0].mxu0
        %v1715 = vadd.f32 %v1619, %v1714
        %v1716 = vpop.f32.mrb[0].mxu0
        %1717 = vmatprep.mubr.bf16.mxu0 0
        %1718 = vmatmul.mubr.bf16.gmra.mrb[0].mxu0 %v1596
        %v1719 = vpop.f32.mrb[0].mxu0
        %v1720 = vadd.f32 %v1619, %v1719
        %v1721 = vpop.f32.mrb[0].mxu0
        %v1722 = vpop.f32.mrb[0].mxu0
        %v1723 = vadd.f32 %v1619, %v1722
        %v1724 = vpop.f32.mrb[0].mxu0
        %1725 = vmatprep.mubr.bf16.mxu0 0
        %1726 = vmatmul.mubr.bf16.gmra.mrb[0].mxu0 %v1597
        %v1727 = vpop.f32.mrb[0].mxu0
        %v1728 = vadd.f32 %v1619, %v1727
        %v1729 = vpop.f32.mrb[0].mxu0
        %v1730 = vpop.f32.mrb[0].mxu0
        %v1731 = vadd.f32 %v1619, %v1730
        %v1732 = vpop.f32.mrb[0].mxu0
        %1733 = vdwg.mxu0
        %v1734 = vmax.f32 %v1704, 0.0
        %v1735 = vmax.f32 %v1707, 0.0
        %v1736 = vmax.f32 %v1712, 0.0
        %v1737 = vmax.f32 %v1715, 0.0
        %v1738 = vmax.f32 %v1720, 0.0
        %v1739 = vmax.f32 %v1723, 0.0
        %v1740 = vmax.f32 %v1728, 0.0
        %v1741 = vmax.f32 %v1731, 0.0
        %v1742 = vpack.c.bf16 %v1735, %v1734
        %v1743 = vpack.c.bf16 %v1737, %v1736
        %v1744 = vpack.c.bf16 %v1739, %v1738
        %v1745 = vpack.c.bf16 %v1741, %v1740
        %v1746 = vld [vmem:[#allocation7] sm:$0xf]
        %v1747 = vld [vmem:[#allocation7 + $0x4] sm:$0xf]
        %v1748 = vld [vmem:[#allocation7 + $0x8] sm:$0xf]
        %v1749 = vld [vmem:[#allocation7 + $0xc] sm:$0xf]
        %v1750 = vld [vmem:[#allocation7 + $0x10] sm:$0xf]
        %v1751 = vld [vmem:[#allocation7 + $0x14] sm:$0xf]
        %v1752 = vld [vmem:[#allocation7 + $0x18] sm:$0xf]
        %v1753 = vld [vmem:[#allocation7 + $0x1c] sm:$0xf]
        %v1754 = vld [vmem:[#allocation7 + $0x20] sm:$0xf]
        %v1755 = vld [vmem:[#allocation7 + $0x24] sm:$0xf]
        %v1756 = vld [vmem:[#allocation7 + $0x28] sm:$0xf]
        %v1757 = vld [vmem:[#allocation7 + $0x2c] sm:$0xf]
        %v1758 = vld [vmem:[#allocation7 + $0x30] sm:$0xf]
        %v1759 = vld [vmem:[#allocation7 + $0x34] sm:$0xf]
        %v1760 = vld [vmem:[#allocation7 + $0x38] sm:$0xf]
        %v1761 = vld [vmem:[#allocation7 + $0x3c] sm:$0xf]
        %v1762 = vld [vmem:[%s9] sm:$0x1]
        %v1764 = vlaneseq
        %v1765 = vshrl.u32 %v1764, 7
        %v1766 = vsub.s32 0, %v1765
        %v1767 = vrot.slane %v1762, %v1766
        %v1785 = vunpack.c.l.b16 %v1746
        %v1786 = vunpack.c.l.b16 %v1747
        %v1787 = vunpack.c.l.b16 %v1748
        %v1788 = vunpack.c.l.b16 %v1749
        %v1789 = vunpack.c.l.b16 %v1750
        %v1790 = vunpack.c.l.b16 %v1751
        %v1791 = vunpack.c.l.b16 %v1752
        %v1792 = vunpack.c.l.b16 %v1753
        %v1793 = vunpack.c.l.b16 %v1754
        %v1794 = vunpack.c.l.b16 %v1755
        %v1795 = vunpack.c.l.b16 %v1756
        %v1796 = vunpack.c.l.b16 %v1757
        %v1797 = vunpack.c.l.b16 %v1758
        %v1798 = vunpack.c.l.b16 %v1759
        %v1799 = vunpack.c.l.b16 %v1760
        %v1800 = vunpack.c.l.b16 %v1761
        %v1801 = vpack.c.b16 %v1786, %v1785
        %v1802 = vpack.c.b16 %v1788, %v1787
        %v1803 = vpack.c.b16 %v1790, %v1789
        %v1804 = vpack.c.b16 %v1792, %v1791
        %v1805 = vpack.c.b16 %v1794, %v1793
        %v1806 = vpack.c.b16 %v1796, %v1795
        %v1807 = vpack.c.b16 %v1798, %v1797
        %v1808 = vpack.c.b16 %v1800, %v1799
        %1817 = vmatprep.subr.bf16.mxu0 0
        %1818 = vmatpush1.bf16.msra.mxu0 %v1801
        %1819 = vmatprep.subr.bf16.mxu0 0
        %1820 = vmatpush1.bf16.msra.mxu0 %v1802
        %1821 = vmatprep.subr.bf16.mxu0 0
        %1822 = vmatpush1.bf16.msra.mxu0 %v1803
        %1823 = vmatprep.subr.bf16.mxu0 0
        %1824 = vmatpush1.bf16.msra.mxu0 %v1804
        %1825 = vmatprep.subr.bf16.mxu0 0
        %1826 = vmatpush1.bf16.msra.mxu0 %v1805
        %1827 = vmatprep.subr.bf16.mxu0 0
        %1828 = vmatpush1.bf16.msra.mxu0 %v1806
        %1829 = vmatprep.subr.bf16.mxu0 0
        %1830 = vmatpush1.bf16.msra.mxu0 %v1807
        %1831 = vmatprep.subr.bf16.mxu0 0
        %1832 = vmatpush1.bf16.msra.mxu0 %v1808
        %1833 = vmatprep.subr.bf16.mxu0 0
        %1834 = vmatpush1.bf16.msra.mxu0 0
        %1835 = vmatprep.subr.bf16.mxu0 0
        %1836 = vmatpush1.bf16.msra.mxu0 0
        %1837 = vmatprep.subr.bf16.mxu0 0
        %1838 = vmatpush1.bf16.msra.mxu0 0
        %1839 = vmatprep.subr.bf16.mxu0 0
        %1840 = vmatpush1.bf16.msra.mxu0 0
        %1841 = vmatprep.subr.bf16.mxu0 0
        %1842 = vmatpush1.bf16.msra.mxu0 0
        %1843 = vmatprep.subr.bf16.mxu0 0
        %1844 = vmatpush1.bf16.msra.mxu0 0
        %1845 = vmatprep.subr.bf16.mxu0 0
        %1846 = vmatpush1.bf16.msra.mxu0 0
        %1847 = vmatprep.subr.bf16.mxu0 0
        %1848 = vmatpush1.bf16.msra.mxu0 0
        %1849 = vmatprep.mubr.bf16.mxu0 0
        %1850 = vmatmul.mubr.bf16.gmra.mrb[0].mxu0 %v1742
        %v1851 = vpop.f32.mrb[0].mxu0
        %v1852 = vadd.f32 %v1767, %v1851
        %v1853 = vpop.f32.mrb[0].mxu0
        %v1854 = vpop.f32.mrb[0].mxu0
        %v1855 = vadd.f32 %v1767, %v1854
        %v1856 = vpop.f32.mrb[0].mxu0
        %1857 = vmatprep.mubr.bf16.mxu0 0
        %1858 = vmatmul.mubr.bf16.gmra.mrb[0].mxu0 %v1743
        %v1859 = vpop.f32.mrb[0].mxu0
        %v1860 = vadd.f32 %v1767, %v1859
        %v1861 = vpop.f32.mrb[0].mxu0
        %v1862 = vpop.f32.mrb[0].mxu0
        %v1863 = vadd.f32 %v1767, %v1862
        %v1864 = vpop.f32.mrb[0].mxu0
        %1865 = vmatprep.mubr.bf16.mxu0 0
        %1866 = vmatmul.mubr.bf16.gmra.mrb[0].mxu0 %v1744
        %v1867 = vpop.f32.mrb[0].mxu0
        %v1868 = vadd.f32 %v1767, %v1867
        %v1869 = vpop.f32.mrb[0].mxu0
        %v1870 = vpop.f32.mrb[0].mxu0
        %v1871 = vadd.f32 %v1767, %v1870
        %v1872 = vpop.f32.mrb[0].mxu0
        %1873 = vmatprep.mubr.bf16.mxu0 0
        %1874 = vmatmul.mubr.bf16.gmra.mrb[0].mxu0 %v1745
        %v1875 = vpop.f32.mrb[0].mxu0
        %v1876 = vadd.f32 %v1767, %v1875
        %v1877 = vpop.f32.mrb[0].mxu0
        %v1878 = vpop.f32.mrb[0].mxu0
        %v1879 = vadd.f32 %v1767, %v1878
        %v1880 = vpop.f32.mrb[0].mxu0
        %1881 = vdwg.mxu0
        %1882 = vst [vmem:[%s395] sm:$0xff] %v1852
        %1883 = vst [vmem:[%s395 + $0x8] sm:$0xff] %v1855
        %1884 = vst [vmem:[%s395 + $0x10] sm:$0xff] %v1860
        %1885 = vst [vmem:[%s395 + $0x18] sm:$0xff] %v1863
        %1886 = vst [vmem:[%s395 + $0x20] sm:$0xff] %v1868
        %1887 = vst [vmem:[%s395 + $0x28] sm:$0xff] %v1871
        %1888 = vst [vmem:[%s395 + $0x30] sm:$0xff] %v1876
        %1889 = vst [vmem:[%s395 + $0x38] sm:$0xff] %v1879
        %s1890 = sand.u32 %s249, 1
        %s1891 = scalar_lea.sflag [#allocation4], %s1890
        %s1892 = sand.u32 %s249, 1
        %s1893 = smul.addr %s1892, 64
        %s1894 = scalar_lea.vmem [#allocation8], %s1893
        // Predicated region
        $region73: #{tpu_custom_call.1} parent=59 // pred_check
          %p1895 = pneg %p259
        $region74: #{tpu_custom_call.1} parent=59 // pred_check_branch
          %1897 = sbr.rel (%p1895) target = $region76
        $region75: #{tpu_custom_call.1} parent=59 // pred_region
          %s1898 = smul.u32 8, %s26
          %s1900 = ssub.s32 1024, 1024
          %1901 = vsyncadd %s1891, %s1900
          %s1902 = smul.addr %s1898, 128
          %s1903 = scalar_lea.hbm %s10, %s1902
          %s1904 = sshll.u32 %s1894, 4
          %s1905 = int_to_ptr.vmem [resolvable:$true] %s1904
          %1910 = dma.vmem_to_hbm [thread:$0]  %s1905, 1024, %s1903, %s1891, 128, 128, 8
        $region76: #{tpu_custom_call.1} parent=59 // pred_fallthru
          _
      $region60: #{tpu_custom_call.1} parent=5 // pred_fallthru
        _
      %p1911 = scmp.le.s32.totalorder 2, %s21
      // Predicated region
      $region77: #{tpu_custom_call.1} parent=5 // pred_check
        %p1912 = pneg %p1911
      $region78: #{tpu_custom_call.1} parent=5 // pred_check_branch
        %1914 = sbr.rel (%p1912) target = $region80
      $region79: #{tpu_custom_call.1} parent=5 // pred_region
        %s1915 = ssub.s32 %s21, 2
        // Predicated region
        $region81: #{tpu_custom_call.1} parent=79 // pred_check
          %p1916 = pneg %p265
        $region82: #{tpu_custom_call.1} parent=79 // pred_check_branch
          %1918 = sbr.rel (%p1916) target = $region84
        $region83: #{tpu_custom_call.1} parent=79 // pred_region
          %s1919 = sand.u32 %s250, 1
          %s1920 = scalar_lea.sflag [#allocation4], %s1919
          %s1921 = sand.u32 %s250, 1
          %s1922 = smul.addr %s1921, 64
          %s1923 = scalar_lea.vmem [#allocation8], %s1922
          %1924 = dma.done %s1920, 1024
        $region84: #{tpu_custom_call.1} parent=79 // pred_fallthru
          _
      $region80: #{tpu_custom_call.1} parent=5 // pred_fallthru
        _
    $region6: #{tpu_custom_call.1} parent=1 // loop_footer
      %s25 = sadd.s32 1, %s21
    $region7: #{tpu_custom_call.1} parent=1 // loop_footer_branch
      %20 = sbr.rel target = $region3
    $region8: #{tpu_custom_call.1} parent=1 // loop_exit
      _
    %1925 = vsyncpa [#allocation3], 1
    %s1926 = scalar_lea.sflag [#allocation3], 1
    %1927 = vsyncpa %s1926, 1
    %1928 = vsyncpa [#allocation6], 1
    %1929 = vsyncpa [#allocation4], 1
    %s1930 = scalar_lea.sflag [#allocation4], 1
    %1931 = vsyncpa %s1930, 1

</llo_original>
